<compile_context>
chip_gen: v6e
topology: v6e:2x2x1
jax: 0.10.0
libtpu: 0.0.40
codegen_flags: <defaults>
</compile_context>

<pallas_src>
import jax
import jax.numpy as jnp
from jax import lax
from jax.experimental import pallas as pl
from jax.experimental.pallas import tpu as pltpu

NEGATIVE_SAMPLE_SIZE = 20


def _log_sigmoid(z):
    # numerically stable logsigmoid(z) = min(z, 0) - log1p(exp(-|z|))
    return jnp.minimum(z, 0.0) - jnp.log1p(jnp.exp(-jnp.abs(z)))


def _round_up(n, m):
    return ((n + m - 1) // m) * m


def embeddings_forward(word_table, ctx_table, x_idx, y_idx, neg_idx, *, batch_tile=256):
    """Equivalent of Embeddings.forward(x, y) with the given negative samples."""
    V, E = word_table.shape
    B = int(x_idx.shape[0])
    NEG = int(neg_idx.shape[0])

    # Batch tile: large (amortizes per-grid-step overhead, fills MXU sublanes),
    # but never larger than the 8-rounded batch so tiny batches stay 1 step.
    TB = min(max(8, _round_up(int(batch_tile), 8)), _round_up(B, 8))
    B_pad = _round_up(B, TB)
    num_tiles = B_pad // TB
    pad = B_pad - B

    # Indices as lane-size-1 int32 columns (VMEM blocks); padding rows use index 0
    # and are masked out inside the kernel before accumulation.
    x_col = jnp.pad(x_idx.astype(jnp.int32), (0, pad)).reshape(B_pad, 1)
    y_col = jnp.pad(y_idx.astype(jnp.int32), (0, pad)).reshape(B_pad, 1)
    n_col = neg_idx.astype(jnp.int32).reshape(NEG, 1)

    def kernel(x_idx_ref, y_idx_ref, neg_idx_ref,   # (TB,1)/(TB,1)/(NEG,1) int32 VMEM
               word_ref, ctx_ref,                   # (V,E) f32 tables, fully in VMEM
               out_ref,                             # (1,1) f32, resident output block
               acc_ref):                            # (TB,1) f32 VMEM partial-sum scratch
        t = pl.program_id(0)

        @pl.when(t == 0)
        def _init():
            acc_ref[...] = jnp.zeros_like(acc_ref)
            out_ref[...] = jnp.zeros_like(out_ref)

        x_ids = x_idx_ref[...]                      # (TB, 1) int32
        y_ids = y_idx_ref[...]                      # (TB, 1) int32
        n_ids = neg_idx_ref[...]                    # (NEG, 1) int32

        # One-hot gather matrices built on the VPU, gathers done on the MXU.
        vocab_iota = lax.broadcasted_iota(jnp.int32, (TB, V), 1)
        onehot_x = (x_ids == vocab_iota).astype(jnp.float32)          # (TB, V)
        onehot_y = (y_ids == vocab_iota).astype(jnp.float32)          # (TB, V)

        x_emb = jnp.dot(onehot_x, word_ref[...],
                        preferred_element_type=jnp.float32)           # (TB, E)
        y_emb = jnp.dot(onehot_y, ctx_ref[...],
                        preferred_element_type=jnp.float32)           # (TB, E)

        neg_iota = lax.broadcasted_iota(jnp.int32, (NEG, V), 1)
        onehot_n = (n_ids == neg_iota).astype(jnp.float32)            # (NEG, V)
        n_emb = jnp.dot(onehot_n, ctx_ref[...],
                        preferred_element_type=jnp.float32)           # (NEG, E)

        # positive term: logsigmoid(<x_b, y_b>)
        pos_score = jnp.sum(x_emb * y_emb, axis=-1, keepdims=True)    # (TB, 1)

        # negative term: sum_k logsigmoid(-<n_k, x_b>)   (MXU matmul)
        neg_score = -lax.dot_general(
            x_emb, n_emb,
            dimension_numbers=(((1,), (1,)), ((), ())),
            preferred_element_type=jnp.float32)                       # (TB, NEG)

        per_row = _log_sigmoid(pos_score) + jnp.sum(
            _log_sigmoid(neg_score), axis=-1, keepdims=True)          # (TB, 1)

        # mask batch-padding rows (B not necessarily a multiple of TB)
        row_id = t * TB + lax.broadcasted_iota(jnp.int32, (TB, 1), 0)
        per_row = jnp.where(row_id < B, per_row, 0.0)

        # cheap per-step vector add; full reduce + lane-sparse store only once
        acc_ref[...] += per_row

        @pl.when(t == pl.num_programs(0) - 1)
        def _finalize():
            total = jnp.sum(acc_ref[...])
            out_ref[...] = (-total * (1.0 / B)).reshape(1, 1)

    grid_spec = pltpu.PrefetchScalarGridSpec(
        num_scalar_prefetch=0,
        grid=(num_tiles,),
        in_specs=[
            pl.BlockSpec((TB, 1), lambda t: (t, 0)),        # x indices (this tile)
            pl.BlockSpec((TB, 1), lambda t: (t, 0)),        # y indices (this tile)
            pl.BlockSpec((NEG, 1), lambda t: (0, 0)),       # shared negative indices
            pl.BlockSpec((V, E), lambda t: (0, 0)),         # word table, fully in VMEM
            pl.BlockSpec((V, E), lambda t: (0, 0)),         # ctx table, fully in VMEM
        ],
        out_specs=pl.BlockSpec((1, 1), lambda t: (0, 0)),
        scratch_shapes=[
            pltpu.VMEM((TB, 1), jnp.float32),               # partial-sum accumulator
        ],
    )

    out = pl.pallas_call(
        kernel,
        out_shape=jax.ShapeDtypeStruct((1, 1), jnp.float32),
        grid_spec=grid_spec,
        compiler_params=pltpu.CompilerParams(
            # sequential: the output block and acc scratch accumulate across steps
            dimension_semantics=("arbitrary",)),
    )(x_col, y_col, n_col, word_table, ctx_table)
    return out[0, 0]


def _reference_loss(word_table, ctx_table, x_idx, y_idx, neg_idx):
    # pure-JAX reference mirroring the PyTorch forward
    x_emb = word_table[x_idx]                       # (B, E)
    y_emb = ctx_table[y_idx]                        # (B, E)
    n_emb = ctx_table[neg_idx]                      # (NEG, E)
    pos = jax.nn.log_sigmoid(jnp.sum(x_emb * y_emb, axis=-1, keepdims=True))
    neg = jnp.sum(jax.nn.log_sigmoid(-(x_emb @ n_emb.T)), axis=-1, keepdims=True)
    return -jnp.mean(pos + neg)


if __name__ == "__main__":
    vocab_size = 1024
    embedding_size = 32
    batch = 13   # deliberately not a multiple of 8 -> exercises padding/masking

    key = jax.random.PRNGKey(0)
    k_word, k_ctx, k_x, k_y, k_neg = jax.random.split(key, 5)

    # nn.Embedding default init ~ N(0, 1)
    word_table = jax.random.normal(k_word, (vocab_size, embedding_size), jnp.float32)
    ctx_table = jax.random.normal(k_ctx, (vocab_size, embedding_size), jnp.float32)

    x_idx = jax.random.randint(k_x, (batch,), 0, vocab_size, jnp.int32)
    y_idx = jax.random.randint(k_y, (batch,), 0, vocab_size, jnp.int32)
    # PyTorch draws negatives with .random_(to=vocab_size); here drawn in the
    # wrapper (glue) and fed to the kernel.
    neg_idx = jax.random.randint(k_neg, (NEGATIVE_SAMPLE_SIZE,), 0, vocab_size, jnp.int32)

    loss = embeddings_forward(word_table, ctx_table, x_idx, y_idx, neg_idx, batch_tile=256)
    jax.block_until_ready(loss)

    ref = _reference_loss(word_table, ctx_table, x_idx, y_idx, neg_idx)
    assert jnp.allclose(loss, ref, rtol=1e-4, atol=1e-5), (loss, ref)

    print("KERNEL_OK")
</pallas_src>

<mosaic_0001>
module attributes {stable_mosaic.version = 11 : i64} {
  func.func @kernel(%arg0: i32, %arg1: memref<16x1xi32, #tpu.memory_space<vmem>>, %arg2: memref<16x1xi32, #tpu.memory_space<vmem>>, %arg3: memref<20x1xi32, #tpu.memory_space<vmem>>, %arg4: memref<1024x32xf32, #tpu.memory_space<vmem>>, %arg5: memref<1024x32xf32, #tpu.memory_space<vmem>>, %arg6: memref<1x1xf32, #tpu.memory_space<vmem>>, %arg7: memref<16x1xf32, #tpu.memory_space<vmem>>) attributes {dimension_semantics = [#tpu.dimension_semantics<arbitrary>], iteration_bounds = array<i64: 1>, scalar_prefetch = 0 : i64, scratch_operands = 1 : i64, tpu.core_type = #tpu.core_type<tc>, window_params = [{transform_indices = @transform_0, window_bounds = array<i64: 16, 1>}, {transform_indices = @transform_1, window_bounds = array<i64: 16, 1>}, {pipeline_mode = #tpu.pipeline_mode<synchronous>, transform_indices = @transform_2, window_bounds = array<i64: 20, 1>}, {pipeline_mode = #tpu.pipeline_mode<synchronous>, transform_indices = @transform_3, window_bounds = array<i64: 1024, 32>}, {pipeline_mode = #tpu.pipeline_mode<synchronous>, transform_indices = @transform_4, window_bounds = array<i64: 1024, 32>}, {pipeline_mode = #tpu.pipeline_mode<synchronous>, transform_indices = @transform_5, window_bounds = array<i64: 1, 1>}]} {
    %c0_i32 = arith.constant 0 : i32
    %0 = arith.cmpi eq, %arg0, %c0_i32 : i32
    %1 = arith.extui %0 : i1 to i32
    %c0_i32_0 = arith.constant 0 : i32
    %2 = arith.cmpi ne, %1, %c0_i32_0 : i32
    scf.if %2 {
      %cst_29 = arith.constant 0.000000e+00 : f32
      %65 = vector.broadcast %cst_29 : f32 to vector<16x1xf32>
      %c0_30 = arith.constant 0 : index
      %c0_31 = arith.constant 0 : index
      %66 = vector.load %arg7[%c0_30, %c0_31] : memref<16x1xf32, #tpu.memory_space<vmem>>, vector<16x1xf32>
      tpu.vector_store %arg7[%c0_30, %c0_31], %65 {strides = array<i32>} : memref<16x1xf32, #tpu.memory_space<vmem>>, vector<16x1xf32>,
      %cst_32 = arith.constant 0.000000e+00 : f32
      %67 = vector.broadcast %cst_32 : f32 to vector<1x1xf32>
      %c0_33 = arith.constant 0 : index
      %c0_34 = arith.constant 0 : index
      %68 = vector.load %arg6[%c0_33, %c0_34] : memref<1x1xf32, #tpu.memory_space<vmem>>, vector<1x1xf32>
      tpu.vector_store %arg6[%c0_33, %c0_34], %67 {strides = array<i32>} : memref<1x1xf32, #tpu.memory_space<vmem>>, vector<1x1xf32>,
    } else {
    }
    %c0 = arith.constant 0 : index
    %c0_1 = arith.constant 0 : index
    %3 = vector.load %arg1[%c0, %c0_1] : memref<16x1xi32, #tpu.memory_space<vmem>>, vector<16x1xi32>
    %c0_2 = arith.constant 0 : index
    %c0_3 = arith.constant 0 : index
    %4 = vector.load %arg2[%c0_2, %c0_3] : memref<16x1xi32, #tpu.memory_space<vmem>>, vector<16x1xi32>
    %c0_4 = arith.constant 0 : index
    %c0_5 = arith.constant 0 : index
    %5 = vector.load %arg3[%c0_4, %c0_5] : memref<20x1xi32, #tpu.memory_space<vmem>>, vector<20x1xi32>
    %6 = tpu.iota {dimensions = array<i32: 1>} : vector<16x1024xi32>
    %7 = vector.broadcast %3 : vector<16x1xi32> to vector<16x1024xi32>
    %8 = arith.cmpi eq, %7, %6 : vector<16x1024xi32>
    %9 = arith.extui %8 : vector<16x1024xi1> to vector<16x1024xi32>
    %10 = arith.sitofp %9 : vector<16x1024xi32> to vector<16x1024xf32>
    %11 = vector.broadcast %4 : vector<16x1xi32> to vector<16x1024xi32>
    %12 = arith.cmpi eq, %11, %6 : vector<16x1024xi32>
    %13 = arith.extui %12 : vector<16x1024xi1> to vector<16x1024xi32>
    %14 = arith.sitofp %13 : vector<16x1024xi32> to vector<16x1024xf32>
    %c0_6 = arith.constant 0 : index
    %c0_7 = arith.constant 0 : index
    %15 = vector.load %arg4[%c0_6, %c0_7] : memref<1024x32xf32, #tpu.memory_space<vmem>>, vector<1024x32xf32>
    %cst = arith.constant dense<0.000000e+00> : vector<16x32xf32>
    %16 = tpu.matmul %10, %15, %cst {dimension_numbers = #tpu.dot_dimension_numbers<[1], [0], [0], [1], [0, 0, 1, 1], [], []>} : vector<16x1024xf32>, vector<1024x32xf32>, vector<16x32xf32> -> vector<16x32xf32>
    %c0_8 = arith.constant 0 : index
    %c0_9 = arith.constant 0 : index
    %17 = vector.load %arg5[%c0_8, %c0_9] : memref<1024x32xf32, #tpu.memory_space<vmem>>, vector<1024x32xf32>
    %cst_10 = arith.constant dense<0.000000e+00> : vector<16x32xf32>
    %18 = tpu.matmul %14, %17, %cst_10 {dimension_numbers = #tpu.dot_dimension_numbers<[1], [0], [0], [1], [0, 0, 1, 1], [], []>} : vector<16x1024xf32>, vector<1024x32xf32>, vector<16x32xf32> -> vector<16x32xf32>
    %19 = tpu.iota {dimensions = array<i32: 1>} : vector<20x1024xi32>
    %20 = vector.broadcast %5 : vector<20x1xi32> to vector<20x1024xi32>
    %21 = arith.cmpi eq, %20, %19 : vector<20x1024xi32>
    %22 = arith.extui %21 : vector<20x1024xi1> to vector<20x1024xi32>
    %23 = arith.sitofp %22 : vector<20x1024xi32> to vector<20x1024xf32>
    %c0_11 = arith.constant 0 : index
    %c0_12 = arith.constant 0 : index
    %24 = vector.load %arg5[%c0_11, %c0_12] : memref<1024x32xf32, #tpu.memory_space<vmem>>, vector<1024x32xf32>
    %cst_13 = arith.constant dense<0.000000e+00> : vector<20x32xf32>
    %25 = tpu.matmul %23, %24, %cst_13 {dimension_numbers = #tpu.dot_dimension_numbers<[1], [0], [0], [1], [0, 0, 1, 1], [], []>} : vector<20x1024xf32>, vector<1024x32xf32>, vector<20x32xf32> -> vector<20x32xf32>
    %26 = arith.mulf %16, %18 : vector<16x32xf32>
    %cst_14 = arith.constant dense<0.000000e+00> : vector<16xf32>
    %27 = vector.multi_reduction <add>, %26, %cst_14 [1] : vector<16x32xf32> to vector<16xf32>
    %28 = vector.shape_cast %27 : vector<16xf32> to vector<16x1xf32>
    %cst_15 = arith.constant dense<0.000000e+00> : vector<16x20xf32>
    %29 = tpu.matmul %16, %25, %cst_15 {dimension_numbers = #tpu.dot_dimension_numbers<[1], [1], [0], [0], [0, 0, 1, 0], [], []>} : vector<16x32xf32>, vector<20x32xf32>, vector<16x20xf32> -> vector<16x20xf32>
    %cst_16 = arith.constant 0.000000e+00 : f32
    %30 = vector.broadcast %cst_16 : f32 to vector<16x20xf32>
    %31 = arith.subf %30, %29 : vector<16x20xf32>
    %cst_17 = arith.constant 0.000000e+00 : f32
    %32 = vector.broadcast %cst_17 : f32 to vector<16x1xf32>
    %33 = arith.minimumf %28, %32 : vector<16x1xf32>
    %34 = math.absf %28 : vector<16x1xf32>
    %cst_18 = arith.constant 0.000000e+00 : f32
    %35 = vector.broadcast %cst_18 : f32 to vector<16x1xf32>
    %36 = arith.subf %35, %34 : vector<16x1xf32>
    %37 = math.exp %36 : vector<16x1xf32>
    %38 = math.log1p %37 : vector<16x1xf32>
    %39 = arith.subf %33, %38 : vector<16x1xf32>
    %cst_19 = arith.constant 0.000000e+00 : f32
    %40 = vector.broadcast %cst_19 : f32 to vector<16x20xf32>
    %41 = arith.minimumf %31, %40 : vector<16x20xf32>
    %42 = math.absf %31 : vector<16x20xf32>
    %cst_20 = arith.constant 0.000000e+00 : f32
    %43 = vector.broadcast %cst_20 : f32 to vector<16x20xf32>
    %44 = arith.subf %43, %42 : vector<16x20xf32>
    %45 = math.exp %44 : vector<16x20xf32>
    %46 = math.log1p %45 : vector<16x20xf32>
    %47 = arith.subf %41, %46 : vector<16x20xf32>
    %cst_21 = arith.constant dense<0.000000e+00> : vector<16xf32>
    %48 = vector.multi_reduction <add>, %47, %cst_21 [1] : vector<16x20xf32> to vector<16xf32>
    %49 = vector.shape_cast %48 : vector<16xf32> to vector<16x1xf32>
    %50 = arith.addf %39, %49 : vector<16x1xf32>
    %c16_i32 = arith.constant 16 : i32
    %51 = arith.muli %arg0, %c16_i32 : i32
    %52 = tpu.iota {dimensions = array<i32: 0>} : vector<16x1xi32>
    %53 = vector.broadcast %51 : i32 to vector<16x1xi32>
    %54 = arith.addi %53, %52 : vector<16x1xi32>
    %c13_i32 = arith.constant 13 : i32
    %55 = vector.broadcast %c13_i32 : i32 to vector<16x1xi32>
    %56 = arith.cmpi slt, %54, %55 : vector<16x1xi32>
    %cst_22 = arith.constant 0.000000e+00 : f32
    %57 = vector.broadcast %cst_22 : f32 to vector<16x1xf32>
    %58 = arith.select %56, %50, %57 : vector<16x1xi1>, vector<16x1xf32>
    %c0_23 = arith.constant 0 : index
    %c0_24 = arith.constant 0 : index
    %59 = vector.load %arg7[%c0_23, %c0_24] : memref<16x1xf32, #tpu.memory_space<vmem>>, vector<16x1xf32>
    %60 = arith.addf %59, %58 : vector<16x1xf32>
    %c0_25 = arith.constant 0 : index
    %c0_26 = arith.constant 0 : index
    %61 = vector.load %arg7[%c0_25, %c0_26] : memref<16x1xf32, #tpu.memory_space<vmem>>, vector<16x1xf32>
    tpu.vector_store %arg7[%c0_25, %c0_26], %60 {strides = array<i32>} : memref<16x1xf32, #tpu.memory_space<vmem>>, vector<16x1xf32>,
    %c0_i32_27 = arith.constant 0 : i32
    %62 = arith.cmpi eq, %arg0, %c0_i32_27 : i32
    %63 = arith.extui %62 : i1 to i32
    %c0_i32_28 = arith.constant 0 : i32
    %64 = arith.cmpi ne, %63, %c0_i32_28 : i32
    scf.if %64 {
      %c0_29 = arith.constant 0 : index
      %c0_30 = arith.constant 0 : index
      %65 = vector.load %arg7[%c0_29, %c0_30] : memref<16x1xf32, #tpu.memory_space<vmem>>, vector<16x1xf32>
      %66 = vector.shape_cast %65 : vector<16x1xf32> to vector<1x16x1xf32>
      %cst_31 = arith.constant dense<0.000000e+00> : vector<1xf32>
      %67 = vector.multi_reduction <add>, %66, %cst_31 [1, 2] : vector<1x16x1xf32> to vector<1xf32>
      %68 = vector.shape_cast %67 : vector<1xf32> to vector<1x1x1xf32>
      %69 = vector.extract %68[0, 0, 0] : f32 from vector<1x1x1xf32>
      %cst_32 = arith.constant 0.000000e+00 : f32
      %70 = arith.subf %cst_32, %69 : f32
      %cst_33 = arith.constant 0.0769230798 : f32
      %71 = arith.mulf %70, %cst_33 : f32
      %72 = vector.broadcast %71 : f32 to vector<1x1xf32>
      %c0_34 = arith.constant 0 : index
      %c0_35 = arith.constant 0 : index
      %73 = vector.load %arg6[%c0_34, %c0_35] : memref<1x1xf32, #tpu.memory_space<vmem>>, vector<1x1xf32>
      tpu.vector_store %arg6[%c0_34, %c0_35], %72 {strides = array<i32>} : memref<1x1xf32, #tpu.memory_space<vmem>>, vector<1x1xf32>,
    } else {
    }
    return
  }
  func.func @transform_0(%arg0: i32) -> (i32, i32) {
    %c0_i32 = arith.constant 0 : i32
    %c0_i32_0 = arith.constant 0 : i32
    return %arg0, %c0_i32 : i32, i32
  }
  func.func @transform_1(%arg0: i32) -> (i32, i32) {
    %c0_i32 = arith.constant 0 : i32
    %c0_i32_0 = arith.constant 0 : i32
    return %arg0, %c0_i32 : i32, i32
  }
  func.func @transform_2(%arg0: i32) -> (i32, i32) {
    %c0_i32 = arith.constant 0 : i32
    %c0_i32_0 = arith.constant 0 : i32
    %c0_i32_1 = arith.constant 0 : i32
    return %c0_i32, %c0_i32_0 : i32, i32
  }
  func.func @transform_3(%arg0: i32) -> (i32, i32) {
    %c0_i32 = arith.constant 0 : i32
    %c0_i32_0 = arith.constant 0 : i32
    %c0_i32_1 = arith.constant 0 : i32
    return %c0_i32, %c0_i32_0 : i32, i32
  }
  func.func @transform_4(%arg0: i32) -> (i32, i32) {
    %c0_i32 = arith.constant 0 : i32
    %c0_i32_0 = arith.constant 0 : i32
    %c0_i32_1 = arith.constant 0 : i32
    return %c0_i32, %c0_i32_0 : i32, i32
  }
  func.func @transform_5(%arg0: i32) -> (i32, i32) {
    %c0_i32 = arith.constant 0 : i32
    %c0_i32_0 = arith.constant 0 : i32
    %c0_i32_1 = arith.constant 0 : i32
    return %c0_i32, %c0_i32_0 : i32, i32
  }
}

</mosaic_0001>

<llo_original>
// kernel: tpu_custom_call.1
$region0: #{tpu_custom_call.1}
  #allocation0 [shape = 'u32[]', space=smem, size = 0x4, offset = 0x4, fixed_abs, tag = 'smem constant byte address 0x4 - core index']
  #allocation1 [shape = 'u32[144,128]{1,0:T(1,128)}', space=vmem, size = 0x12000, scoped, tag = 'internal scratch']
  #allocation2 [shape = 'f32[16,1]{1,0:T(8,128)}', space=vmem, size = 0x2000, scoped, tag = 'scratch operand']
  %s0 = inlined_call_operand.vmem [shape: s32[16,1], index: 0, kind: input, shape index: {}]
  %s1 = inlined_call_operand.vmem [shape: s32[16,1], index: 1, kind: input, shape index: {}]
  %s2 = inlined_call_operand.vmem [shape: s32[20,1], index: 2, kind: input, shape index: {}]
  %s3 = inlined_call_operand.vmem [shape: f32[1024,32], index: 3, kind: input, shape index: {}]
  %s4 = inlined_call_operand.vmem [shape: f32[1024,32], index: 4, kind: input, shape index: {}]
  %s5 = inlined_call_operand.hbm [shape: f32[1,1], index: 5, kind: output, shape index: {}]
  %s6 = sld [smem:[#allocation0]]
  $region38: #{tpu_custom_call.1} parent=0
    _
  %s8 = ssub.s32 1, %s6
  %s9 = scalar_select 0, %s8, %s6
  $region1: #{tpu_custom_call.1} parent=0
    #allocation3 [shape = 'u8[512]{0}', space=vmem, size = 0x400, scoped, tag = 'output window, operand 0, single buffered']
    #allocation4 [shape = 's32[1]{0}', space=sflag, size = 0x4, scoped, tag = 'scoped memory for tpu_custom_call.1']
    %10 = vsyncpa [#allocation4], 0
    // Predicated region
    $region2: #{tpu_custom_call.1} parent=1 // pred_check
      _
    $region3: #{tpu_custom_call.1} parent=1 // pred_check_branch
      %12 = sbr.rel (0) target = $region5
    $region4: #{tpu_custom_call.1} parent=1 // pred_region
      _
    $region5: #{tpu_custom_call.1} parent=1 // pred_fallthru
      _
    // Predicated region
    $region6: #{tpu_custom_call.1} parent=1 // pred_check
      _
    $region7: #{tpu_custom_call.1} parent=1 // pred_check_branch
      %14 = sbr.rel (0) target = $region9
    $region8: #{tpu_custom_call.1} parent=1 // pred_region
      _
    $region9: #{tpu_custom_call.1} parent=1 // pred_fallthru
      _
    // Predicated region
    $region10: #{tpu_custom_call.1} parent=1 // pred_check
      _
    $region11: #{tpu_custom_call.1} parent=1 // pred_check_branch
      %16 = sbr.rel (0) target = $region13
    $region12: #{tpu_custom_call.1} parent=1 // pred_region
      _
    $region13: #{tpu_custom_call.1} parent=1 // pred_fallthru
      _
    // Predicated region
    $region14: #{tpu_custom_call.1} parent=1 // pred_check
      _
    $region15: #{tpu_custom_call.1} parent=1 // pred_check_branch
      %18 = sbr.rel (0) target = $region17
    $region16: #{tpu_custom_call.1} parent=1 // pred_region
      _
    $region17: #{tpu_custom_call.1} parent=1 // pred_fallthru
      _
    // Predicated region
    $region18: #{tpu_custom_call.1} parent=1 // pred_check
      _
    $region19: #{tpu_custom_call.1} parent=1 // pred_check_branch
      %20 = sbr.rel (0) target = $region21
    $region20: #{tpu_custom_call.1} parent=1 // pred_region
      _
    $region21: #{tpu_custom_call.1} parent=1 // pred_fallthru
      _
    %p21 = scmp.eq.s32.totalorder 0, 0
    // Predicated region
    $region22: #{tpu_custom_call.1} parent=1 // pred_check
      %p22 = pneg %p21
    $region23: #{tpu_custom_call.1} parent=1 // pred_check_branch
      %24 = sbr.rel (%p22) target = $region25
    $region24: #{tpu_custom_call.1} parent=1 // pred_region
      %vm25 = vcmask 7168
      %26 = vst.msk [vmem:[#allocation2] sm:$0xff] %vm25, 0.0
      %27 = vst.msk [vmem:[#allocation2 + $0x8] sm:$0xff] %vm25, 0.0
      %vm28 = vcmask 0
      %29 = vst.msk [vmem:[#allocation3] sm:$0x1] %vm28, 0.0
    $region25: #{tpu_custom_call.1} parent=1 // pred_fallthru
      _
    %v30 = vld [vmem:[%s0] sm:$0xff]
    %v31 = vld [vmem:[%s0 + $0x8] sm:$0xff]
    %v32 = vld [vmem:[%s1] sm:$0xff]
    %v33 = vld [vmem:[%s1 + $0x8] sm:$0xff]
    %v34 = vld [vmem:[%s2] sm:$0xff]
    %v35 = vld [vmem:[%s2 + $0x8] sm:$0xff]
    %v36 = vld [vmem:[%s2 + $0x10] sm:$0xf]
    %v37 = vlaneseq
    %v38 = vand.u32 %v37, 127
    %v39 = vadd.s32 %v38, 128
    %v40 = vadd.s32 %v38, 256
    %v41 = vadd.s32 %v38, 384
    %v42 = vadd.s32 %v38, 512
    %v43 = vadd.s32 %v38, 640
    %v44 = vadd.s32 %v38, 768
    %v45 = vadd.s32 %v38, 896
    %46 = vset.pattern.permute.xlu0 0
    %47 = vperm.xlu0 %46, %v30
    %v48 = vpop.permute.xlu0 %47
    %49 = vset.pattern.permute.xlu0 0
    %50 = vperm.xlu0 %49, %v31
    %v51 = vpop.permute.xlu0 %50
    %vm52 = vcmp.eq.s32.totalorder %v48, %v38
    %vm53 = vcmp.eq.s32.totalorder %v48, %v39
    %vm54 = vcmp.eq.s32.totalorder %v48, %v40
    %vm55 = vcmp.eq.s32.totalorder %v48, %v41
    %vm56 = vcmp.eq.s32.totalorder %v48, %v42
    %vm57 = vcmp.eq.s32.totalorder %v48, %v43
    %vm58 = vcmp.eq.s32.totalorder %v48, %v44
    %vm59 = vcmp.eq.s32.totalorder %v48, %v45
    %vm60 = vcmp.eq.s32.totalorder %v51, %v38
    %vm61 = vcmp.eq.s32.totalorder %v51, %v39
    %vm62 = vcmp.eq.s32.totalorder %v51, %v40
    %vm63 = vcmp.eq.s32.totalorder %v51, %v41
    %vm64 = vcmp.eq.s32.totalorder %v51, %v42
    %vm65 = vcmp.eq.s32.totalorder %v51, %v43
    %vm66 = vcmp.eq.s32.totalorder %v51, %v44
    %vm67 = vcmp.eq.s32.totalorder %v51, %v45
    %v68 = vsel %vm52, 1, 0
    %v69 = vsel %vm53, 1, 0
    %v70 = vsel %vm54, 1, 0
    %v71 = vsel %vm55, 1, 0
    %v72 = vsel %vm56, 1, 0
    %v73 = vsel %vm57, 1, 0
    %v74 = vsel %vm58, 1, 0
    %v75 = vsel %vm59, 1, 0
    %v76 = vsel %vm60, 1, 0
    %v77 = vsel %vm61, 1, 0
    %v78 = vsel %vm62, 1, 0
    %v79 = vsel %vm63, 1, 0
    %v80 = vsel %vm64, 1, 0
    %v81 = vsel %vm65, 1, 0
    %v82 = vsel %vm66, 1, 0
    %v83 = vsel %vm67, 1, 0
    %v84 = vcvt.s32.f32 %v68
    %v85 = vcvt.s32.f32 %v69
    %v86 = vcvt.s32.f32 %v70
    %v87 = vcvt.s32.f32 %v71
    %v88 = vcvt.s32.f32 %v72
    %v89 = vcvt.s32.f32 %v73
    %v90 = vcvt.s32.f32 %v74
    %v91 = vcvt.s32.f32 %v75
    %v92 = vcvt.s32.f32 %v76
    %v93 = vcvt.s32.f32 %v77
    %v94 = vcvt.s32.f32 %v78
    %v95 = vcvt.s32.f32 %v79
    %v96 = vcvt.s32.f32 %v80
    %v97 = vcvt.s32.f32 %v81
    %v98 = vcvt.s32.f32 %v82
    %v99 = vcvt.s32.f32 %v83
    %100 = vset.pattern.permute.xlu0 0
    %101 = vperm.xlu0 %100, %v32
    %v102 = vpop.permute.xlu0 %101
    %103 = vset.pattern.permute.xlu0 0
    %104 = vperm.xlu0 %103, %v33
    %v105 = vpop.permute.xlu0 %104
    %vm106 = vcmp.eq.s32.totalorder %v102, %v38
    %vm107 = vcmp.eq.s32.totalorder %v102, %v39
    %vm108 = vcmp.eq.s32.totalorder %v102, %v40
    %vm109 = vcmp.eq.s32.totalorder %v102, %v41
    %vm110 = vcmp.eq.s32.totalorder %v102, %v42
    %vm111 = vcmp.eq.s32.totalorder %v102, %v43
    %vm112 = vcmp.eq.s32.totalorder %v102, %v44
    %vm113 = vcmp.eq.s32.totalorder %v102, %v45
    %vm114 = vcmp.eq.s32.totalorder %v105, %v38
    %vm115 = vcmp.eq.s32.totalorder %v105, %v39
    %vm116 = vcmp.eq.s32.totalorder %v105, %v40
    %vm117 = vcmp.eq.s32.totalorder %v105, %v41
    %vm118 = vcmp.eq.s32.totalorder %v105, %v42
    %vm119 = vcmp.eq.s32.totalorder %v105, %v43
    %vm120 = vcmp.eq.s32.totalorder %v105, %v44
    %vm121 = vcmp.eq.s32.totalorder %v105, %v45
    %v122 = vsel %vm106, 1, 0
    %v123 = vsel %vm107, 1, 0
    %v124 = vsel %vm108, 1, 0
    %v125 = vsel %vm109, 1, 0
    %v126 = vsel %vm110, 1, 0
    %v127 = vsel %vm111, 1, 0
    %v128 = vsel %vm112, 1, 0
    %v129 = vsel %vm113, 1, 0
    %v130 = vsel %vm114, 1, 0
    %v131 = vsel %vm115, 1, 0
    %v132 = vsel %vm116, 1, 0
    %v133 = vsel %vm117, 1, 0
    %v134 = vsel %vm118, 1, 0
    %v135 = vsel %vm119, 1, 0
    %v136 = vsel %vm120, 1, 0
    %v137 = vsel %vm121, 1, 0
    %v138 = vcvt.s32.f32 %v122
    %v139 = vcvt.s32.f32 %v123
    %v140 = vcvt.s32.f32 %v124
    %v141 = vcvt.s32.f32 %v125
    %v142 = vcvt.s32.f32 %v126
    %v143 = vcvt.s32.f32 %v127
    %v144 = vcvt.s32.f32 %v128
    %v145 = vcvt.s32.f32 %v129
    %v146 = vcvt.s32.f32 %v130
    %v147 = vcvt.s32.f32 %v131
    %v148 = vcvt.s32.f32 %v132
    %v149 = vcvt.s32.f32 %v133
    %v150 = vcvt.s32.f32 %v134
    %v151 = vcvt.s32.f32 %v135
    %v152 = vcvt.s32.f32 %v136
    %v153 = vcvt.s32.f32 %v137
    %v154 = vld [vmem:[%s3] sm:$0xff]
    %v155 = vld [vmem:[%s3 + $0x8] sm:$0xff]
    %v156 = vld [vmem:[%s3 + $0x10] sm:$0xff]
    %v157 = vld [vmem:[%s3 + $0x18] sm:$0xff]
    %v158 = vld [vmem:[%s3 + $0x20] sm:$0xff]
    %v159 = vld [vmem:[%s3 + $0x28] sm:$0xff]
    %v160 = vld [vmem:[%s3 + $0x30] sm:$0xff]
    %v161 = vld [vmem:[%s3 + $0x38] sm:$0xff]
    %v162 = vld [vmem:[%s3 + $0x40] sm:$0xff]
    %v163 = vld [vmem:[%s3 + $0x48] sm:$0xff]
    %v164 = vld [vmem:[%s3 + $0x50] sm:$0xff]
    %v165 = vld [vmem:[%s3 + $0x58] sm:$0xff]
    %v166 = vld [vmem:[%s3 + $0x60] sm:$0xff]
    %v167 = vld [vmem:[%s3 + $0x68] sm:$0xff]
    %v168 = vld [vmem:[%s3 + $0x70] sm:$0xff]
    %v169 = vld [vmem:[%s3 + $0x78] sm:$0xff]
    %v170 = vld [vmem:[%s3 + $0x80] sm:$0xff]
    %v171 = vld [vmem:[%s3 + $0x88] sm:$0xff]
    %v172 = vld [vmem:[%s3 + $0x90] sm:$0xff]
    %v173 = vld [vmem:[%s3 + $0x98] sm:$0xff]
    %v174 = vld [vmem:[%s3 + $0xa0] sm:$0xff]
    %v175 = vld [vmem:[%s3 + $0xa8] sm:$0xff]
    %v176 = vld [vmem:[%s3 + $0xb0] sm:$0xff]
    %v177 = vld [vmem:[%s3 + $0xb8] sm:$0xff]
    %v178 = vld [vmem:[%s3 + $0xc0] sm:$0xff]
    %v179 = vld [vmem:[%s3 + $0xc8] sm:$0xff]
    %v180 = vld [vmem:[%s3 + $0xd0] sm:$0xff]
    %v181 = vld [vmem:[%s3 + $0xd8] sm:$0xff]
    %v182 = vld [vmem:[%s3 + $0xe0] sm:$0xff]
    %v183 = vld [vmem:[%s3 + $0xe8] sm:$0xff]
    %v184 = vld [vmem:[%s3 + $0xf0] sm:$0xff]
    %v185 = vld [vmem:[%s3 + $0xf8] sm:$0xff]
    %v186 = vld [vmem:[%s3 + $0x100] sm:$0xff]
    %v187 = vld [vmem:[%s3 + $0x108] sm:$0xff]
    %v188 = vld [vmem:[%s3 + $0x110] sm:$0xff]
    %v189 = vld [vmem:[%s3 + $0x118] sm:$0xff]
    %v190 = vld [vmem:[%s3 + $0x120] sm:$0xff]
    %v191 = vld [vmem:[%s3 + $0x128] sm:$0xff]
    %v192 = vld [vmem:[%s3 + $0x130] sm:$0xff]
    %v193 = vld [vmem:[%s3 + $0x138] sm:$0xff]
    %v194 = vld [vmem:[%s3 + $0x140] sm:$0xff]
    %v195 = vld [vmem:[%s3 + $0x148] sm:$0xff]
    %v196 = vld [vmem:[%s3 + $0x150] sm:$0xff]
    %v197 = vld [vmem:[%s3 + $0x158] sm:$0xff]
    %v198 = vld [vmem:[%s3 + $0x160] sm:$0xff]
    %v199 = vld [vmem:[%s3 + $0x168] sm:$0xff]
    %v200 = vld [vmem:[%s3 + $0x170] sm:$0xff]
    %v201 = vld [vmem:[%s3 + $0x178] sm:$0xff]
    %v202 = vld [vmem:[%s3 + $0x180] sm:$0xff]
    %v203 = vld [vmem:[%s3 + $0x188] sm:$0xff]
    %v204 = vld [vmem:[%s3 + $0x190] sm:$0xff]
    %v205 = vld [vmem:[%s3 + $0x198] sm:$0xff]
    %v206 = vld [vmem:[%s3 + $0x1a0] sm:$0xff]
    %v207 = vld [vmem:[%s3 + $0x1a8] sm:$0xff]
    %v208 = vld [vmem:[%s3 + $0x1b0] sm:$0xff]
    %v209 = vld [vmem:[%s3 + $0x1b8] sm:$0xff]
    %v210 = vld [vmem:[%s3 + $0x1c0] sm:$0xff]
    %v211 = vld [vmem:[%s3 + $0x1c8] sm:$0xff]
    %v212 = vld [vmem:[%s3 + $0x1d0] sm:$0xff]
    %v213 = vld [vmem:[%s3 + $0x1d8] sm:$0xff]
    %v214 = vld [vmem:[%s3 + $0x1e0] sm:$0xff]
    %v215 = vld [vmem:[%s3 + $0x1e8] sm:$0xff]
    %v216 = vld [vmem:[%s3 + $0x1f0] sm:$0xff]
    %v217 = vld [vmem:[%s3 + $0x1f8] sm:$0xff]
    %v218 = vld [vmem:[%s3 + $0x200] sm:$0xff]
    %v219 = vld [vmem:[%s3 + $0x208] sm:$0xff]
    %v220 = vld [vmem:[%s3 + $0x210] sm:$0xff]
    %v221 = vld [vmem:[%s3 + $0x218] sm:$0xff]
    %v222 = vld [vmem:[%s3 + $0x220] sm:$0xff]
    %v223 = vld [vmem:[%s3 + $0x228] sm:$0xff]
    %v224 = vld [vmem:[%s3 + $0x230] sm:$0xff]
    %v225 = vld [vmem:[%s3 + $0x238] sm:$0xff]
    %v226 = vld [vmem:[%s3 + $0x240] sm:$0xff]
    %v227 = vld [vmem:[%s3 + $0x248] sm:$0xff]
    %v228 = vld [vmem:[%s3 + $0x250] sm:$0xff]
    %v229 = vld [vmem:[%s3 + $0x258] sm:$0xff]
    %v230 = vld [vmem:[%s3 + $0x260] sm:$0xff]
    %v231 = vld [vmem:[%s3 + $0x268] sm:$0xff]
    %v232 = vld [vmem:[%s3 + $0x270] sm:$0xff]
    %v233 = vld [vmem:[%s3 + $0x278] sm:$0xff]
    %v234 = vld [vmem:[%s3 + $0x280] sm:$0xff]
    %v235 = vld [vmem:[%s3 + $0x288] sm:$0xff]
    %v236 = vld [vmem:[%s3 + $0x290] sm:$0xff]
    %v237 = vld [vmem:[%s3 + $0x298] sm:$0xff]
    %v238 = vld [vmem:[%s3 + $0x2a0] sm:$0xff]
    %v239 = vld [vmem:[%s3 + $0x2a8] sm:$0xff]
    %v240 = vld [vmem:[%s3 + $0x2b0] sm:$0xff]
    %v241 = vld [vmem:[%s3 + $0x2b8] sm:$0xff]
    %v242 = vld [vmem:[%s3 + $0x2c0] sm:$0xff]
    %v243 = vld [vmem:[%s3 + $0x2c8] sm:$0xff]
    %v244 = vld [vmem:[%s3 + $0x2d0] sm:$0xff]
    %v245 = vld [vmem:[%s3 + $0x2d8] sm:$0xff]
    %v246 = vld [vmem:[%s3 + $0x2e0] sm:$0xff]
    %v247 = vld [vmem:[%s3 + $0x2e8] sm:$0xff]
    %v248 = vld [vmem:[%s3 + $0x2f0] sm:$0xff]
    %v249 = vld [vmem:[%s3 + $0x2f8] sm:$0xff]
    %v250 = vld [vmem:[%s3 + $0x300] sm:$0xff]
    %v251 = vld [vmem:[%s3 + $0x308] sm:$0xff]
    %v252 = vld [vmem:[%s3 + $0x310] sm:$0xff]
    %v253 = vld [vmem:[%s3 + $0x318] sm:$0xff]
    %v254 = vld [vmem:[%s3 + $0x320] sm:$0xff]
    %v255 = vld [vmem:[%s3 + $0x328] sm:$0xff]
    %v256 = vld [vmem:[%s3 + $0x330] sm:$0xff]
    %v257 = vld [vmem:[%s3 + $0x338] sm:$0xff]
    %v258 = vld [vmem:[%s3 + $0x340] sm:$0xff]
    %v259 = vld [vmem:[%s3 + $0x348] sm:$0xff]
    %v260 = vld [vmem:[%s3 + $0x350] sm:$0xff]
    %v261 = vld [vmem:[%s3 + $0x358] sm:$0xff]
    %v262 = vld [vmem:[%s3 + $0x360] sm:$0xff]
    %v263 = vld [vmem:[%s3 + $0x368] sm:$0xff]
    %v264 = vld [vmem:[%s3 + $0x370] sm:$0xff]
    %v265 = vld [vmem:[%s3 + $0x378] sm:$0xff]
    %v266 = vld [vmem:[%s3 + $0x380] sm:$0xff]
    %v267 = vld [vmem:[%s3 + $0x388] sm:$0xff]
    %v268 = vld [vmem:[%s3 + $0x390] sm:$0xff]
    %v269 = vld [vmem:[%s3 + $0x398] sm:$0xff]
    %v270 = vld [vmem:[%s3 + $0x3a0] sm:$0xff]
    %v271 = vld [vmem:[%s3 + $0x3a8] sm:$0xff]
    %v272 = vld [vmem:[%s3 + $0x3b0] sm:$0xff]
    %v273 = vld [vmem:[%s3 + $0x3b8] sm:$0xff]
    %v274 = vld [vmem:[%s3 + $0x3c0] sm:$0xff]
    %v275 = vld [vmem:[%s3 + $0x3c8] sm:$0xff]
    %v276 = vld [vmem:[%s3 + $0x3d0] sm:$0xff]
    %v277 = vld [vmem:[%s3 + $0x3d8] sm:$0xff]
    %v278 = vld [vmem:[%s3 + $0x3e0] sm:$0xff]
    %v279 = vld [vmem:[%s3 + $0x3e8] sm:$0xff]
    %v280 = vld [vmem:[%s3 + $0x3f0] sm:$0xff]
    %v281 = vld [vmem:[%s3 + $0x3f8] sm:$0xff]
    %282 = vmatprep.subr.mxu0 0.0
    %283 = vmatpush1.msra.mxu0 %v169
    %284 = vmatprep.subr.mxu0 0.0
    %285 = vmatpush1.msra.mxu0 %v168
    %286 = vmatprep.subr.mxu0 0.0
    %287 = vmatpush1.msra.mxu0 %v167
    %288 = vmatprep.subr.mxu0 0.0
    %289 = vmatpush1.msra.mxu0 %v166
    %290 = vmatprep.subr.mxu0 0.0
    %291 = vmatpush1.msra.mxu0 %v165
    %292 = vmatprep.subr.mxu0 0.0
    %293 = vmatpush1.msra.mxu0 %v164
    %294 = vmatprep.subr.mxu0 0.0
    %295 = vmatpush1.msra.mxu0 %v163
    %296 = vmatprep.subr.mxu0 0.0
    %297 = vmatpush1.msra.mxu0 %v162
    %298 = vmatprep.subr.mxu0 0.0
    %299 = vmatpush1.msra.mxu0 %v161
    %300 = vmatprep.subr.mxu0 0.0
    %301 = vmatpush1.msra.mxu0 %v160
    %302 = vmatprep.subr.mxu0 0.0
    %303 = vmatpush1.msra.mxu0 %v159
    %304 = vmatprep.subr.mxu0 0.0
    %305 = vmatpush1.msra.mxu0 %v158
    %306 = vmatprep.subr.mxu0 0.0
    %307 = vmatpush1.msra.mxu0 %v157
    %308 = vmatprep.subr.mxu0 0.0
    %309 = vmatpush1.msra.mxu0 %v156
    %310 = vmatprep.subr.mxu0 0.0
    %311 = vmatpush1.msra.mxu0 %v155
    %312 = vmatprep.subr.mxu0 0.0
    %313 = vmatpush1.msra.mxu0 %v154
    %314 = vmatprep.subr.mxu0 0.0
    %315 = vmatpush2.msra.mxu0 %v185
    %316 = vmatprep.subr.mxu0 0.0
    %317 = vmatpush2.msra.mxu0 %v184
    %318 = vmatprep.subr.mxu0 0.0
    %319 = vmatpush2.msra.mxu0 %v183
    %320 = vmatprep.subr.mxu0 0.0
    %321 = vmatpush2.msra.mxu0 %v182
    %322 = vmatprep.subr.mxu0 0.0
    %323 = vmatpush2.msra.mxu0 %v181
    %324 = vmatprep.subr.mxu0 0.0
    %325 = vmatpush2.msra.mxu0 %v180
    %326 = vmatprep.subr.mxu0 0.0
    %327 = vmatpush2.msra.mxu0 %v179
    %328 = vmatprep.subr.mxu0 0.0
    %329 = vmatpush2.msra.mxu0 %v178
    %330 = vmatprep.subr.mxu0 0.0
    %331 = vmatpush2.msra.mxu0 %v177
    %332 = vmatprep.subr.mxu0 0.0
    %333 = vmatpush2.msra.mxu0 %v176
    %334 = vmatprep.subr.mxu0 0.0
    %335 = vmatpush2.msra.mxu0 %v175
    %336 = vmatprep.subr.mxu0 0.0
    %337 = vmatpush2.msra.mxu0 %v174
    %338 = vmatprep.subr.mxu0 0.0
    %339 = vmatpush2.msra.mxu0 %v173
    %340 = vmatprep.subr.mxu0 0.0
    %341 = vmatpush2.msra.mxu0 %v172
    %342 = vmatprep.subr.mxu0 0.0
    %343 = vmatpush2.msra.mxu0 %v171
    %344 = vmatprep.subr.mxu0 0.0
    %345 = vmatpush2.msra.mxu0 %v170
    %346 = vmatprep.mubr.f32.mxu0 %v85
    %347 = vmatmul.mubr.f32.gmra.mxu0 %v84
    %v348 = vpop.f32.mrf.mxu0
    %v349 = vadd.f32 0.0, %v348
    %v350 = vpop.f32.mrf.mxu0
    %351 = vmatprep.mubr.f32.mxu0 %v93
    %352 = vmatmul.mubr.f32.gmra.mxu0 %v92
    %v353 = vpop.f32.mrf.mxu0
    %v354 = vadd.f32 0.0, %v353
    %v355 = vpop.f32.mrf.mxu0
    %356 = vdwg.mxu0
    %357 = vmatprep.subr.mxu0 0.0
    %358 = vmatpush1.msra.mxu0 %v201
    %359 = vmatprep.subr.mxu0 0.0
    %360 = vmatpush1.msra.mxu0 %v200
    %361 = vmatprep.subr.mxu0 0.0
    %362 = vmatpush1.msra.mxu0 %v199
    %363 = vmatprep.subr.mxu0 0.0
    %364 = vmatpush1.msra.mxu0 %v198
    %365 = vmatprep.subr.mxu0 0.0
    %366 = vmatpush1.msra.mxu0 %v197
    %367 = vmatprep.subr.mxu0 0.0
    %368 = vmatpush1.msra.mxu0 %v196
    %369 = vmatprep.subr.mxu0 0.0
    %370 = vmatpush1.msra.mxu0 %v195
    %371 = vmatprep.subr.mxu0 0.0
    %372 = vmatpush1.msra.mxu0 %v194
    %373 = vmatprep.subr.mxu0 0.0
    %374 = vmatpush1.msra.mxu0 %v193
    %375 = vmatprep.subr.mxu0 0.0
    %376 = vmatpush1.msra.mxu0 %v192
    %377 = vmatprep.subr.mxu0 0.0
    %378 = vmatpush1.msra.mxu0 %v191
    %379 = vmatprep.subr.mxu0 0.0
    %380 = vmatpush1.msra.mxu0 %v190
    %381 = vmatprep.subr.mxu0 0.0
    %382 = vmatpush1.msra.mxu0 %v189
    %383 = vmatprep.subr.mxu0 0.0
    %384 = vmatpush1.msra.mxu0 %v188
    %385 = vmatprep.subr.mxu0 0.0
    %386 = vmatpush1.msra.mxu0 %v187
    %387 = vmatprep.subr.mxu0 0.0
    %388 = vmatpush1.msra.mxu0 %v186
    %389 = vmatprep.subr.mxu0 0.0
    %390 = vmatpush2.msra.mxu0 %v217
    %391 = vmatprep.subr.mxu0 0.0
    %392 = vmatpush2.msra.mxu0 %v216
    %393 = vmatprep.subr.mxu0 0.0
    %394 = vmatpush2.msra.mxu0 %v215
    %395 = vmatprep.subr.mxu0 0.0
    %396 = vmatpush2.msra.mxu0 %v214
    %397 = vmatprep.subr.mxu0 0.0
    %398 = vmatpush2.msra.mxu0 %v213
    %399 = vmatprep.subr.mxu0 0.0
    %400 = vmatpush2.msra.mxu0 %v212
    %401 = vmatprep.subr.mxu0 0.0
    %402 = vmatpush2.msra.mxu0 %v211
    %403 = vmatprep.subr.mxu0 0.0
    %404 = vmatpush2.msra.mxu0 %v210
    %405 = vmatprep.subr.mxu0 0.0
    %406 = vmatpush2.msra.mxu0 %v209
    %407 = vmatprep.subr.mxu0 0.0
    %408 = vmatpush2.msra.mxu0 %v208
    %409 = vmatprep.subr.mxu0 0.0
    %410 = vmatpush2.msra.mxu0 %v207
    %411 = vmatprep.subr.mxu0 0.0
    %412 = vmatpush2.msra.mxu0 %v206
    %413 = vmatprep.subr.mxu0 0.0
    %414 = vmatpush2.msra.mxu0 %v205
    %415 = vmatprep.subr.mxu0 0.0
    %416 = vmatpush2.msra.mxu0 %v204
    %417 = vmatprep.subr.mxu0 0.0
    %418 = vmatpush2.msra.mxu0 %v203
    %419 = vmatprep.subr.mxu0 0.0
    %420 = vmatpush2.msra.mxu0 %v202
    %421 = vmatprep.mubr.f32.mxu0 %v87
    %422 = vmatmul.mubr.f32.gmra.mxu0 %v86
    %v423 = vpop.f32.mrf.mxu0
    %v424 = vadd.f32 %v349, %v423
    %v425 = vpop.f32.mrf.mxu0
    %426 = vmatprep.mubr.f32.mxu0 %v95
    %427 = vmatmul.mubr.f32.gmra.mxu0 %v94
    %v428 = vpop.f32.mrf.mxu0
    %v429 = vadd.f32 %v354, %v428
    %v430 = vpop.f32.mrf.mxu0
    %431 = vdwg.mxu0
    %432 = vmatprep.subr.mxu0 0.0
    %433 = vmatpush1.msra.mxu0 %v233
    %434 = vmatprep.subr.mxu0 0.0
    %435 = vmatpush1.msra.mxu0 %v232
    %436 = vmatprep.subr.mxu0 0.0
    %437 = vmatpush1.msra.mxu0 %v231
    %438 = vmatprep.subr.mxu0 0.0
    %439 = vmatpush1.msra.mxu0 %v230
    %440 = vmatprep.subr.mxu0 0.0
    %441 = vmatpush1.msra.mxu0 %v229
    %442 = vmatprep.subr.mxu0 0.0
    %443 = vmatpush1.msra.mxu0 %v228
    %444 = vmatprep.subr.mxu0 0.0
    %445 = vmatpush1.msra.mxu0 %v227
    %446 = vmatprep.subr.mxu0 0.0
    %447 = vmatpush1.msra.mxu0 %v226
    %448 = vmatprep.subr.mxu0 0.0
    %449 = vmatpush1.msra.mxu0 %v225
    %450 = vmatprep.subr.mxu0 0.0
    %451 = vmatpush1.msra.mxu0 %v224
    %452 = vmatprep.subr.mxu0 0.0
    %453 = vmatpush1.msra.mxu0 %v223
    %454 = vmatprep.subr.mxu0 0.0
    %455 = vmatpush1.msra.mxu0 %v222
    %456 = vmatprep.subr.mxu0 0.0
    %457 = vmatpush1.msra.mxu0 %v221
    %458 = vmatprep.subr.mxu0 0.0
    %459 = vmatpush1.msra.mxu0 %v220
    %460 = vmatprep.subr.mxu0 0.0
    %461 = vmatpush1.msra.mxu0 %v219
    %462 = vmatprep.subr.mxu0 0.0
    %463 = vmatpush1.msra.mxu0 %v218
    %464 = vmatprep.subr.mxu0 0.0
    %465 = vmatpush2.msra.mxu0 %v249
    %466 = vmatprep.subr.mxu0 0.0
    %467 = vmatpush2.msra.mxu0 %v248
    %468 = vmatprep.subr.mxu0 0.0
    %469 = vmatpush2.msra.mxu0 %v247
    %470 = vmatprep.subr.mxu0 0.0
    %471 = vmatpush2.msra.mxu0 %v246
    %472 = vmatprep.subr.mxu0 0.0
    %473 = vmatpush2.msra.mxu0 %v245
    %474 = vmatprep.subr.mxu0 0.0
    %475 = vmatpush2.msra.mxu0 %v244
    %476 = vmatprep.subr.mxu0 0.0
    %477 = vmatpush2.msra.mxu0 %v243
    %478 = vmatprep.subr.mxu0 0.0
    %479 = vmatpush2.msra.mxu0 %v242
    %480 = vmatprep.subr.mxu0 0.0
    %481 = vmatpush2.msra.mxu0 %v241
    %482 = vmatprep.subr.mxu0 0.0
    %483 = vmatpush2.msra.mxu0 %v240
    %484 = vmatprep.subr.mxu0 0.0
    %485 = vmatpush2.msra.mxu0 %v239
    %486 = vmatprep.subr.mxu0 0.0
    %487 = vmatpush2.msra.mxu0 %v238
    %488 = vmatprep.subr.mxu0 0.0
    %489 = vmatpush2.msra.mxu0 %v237
    %490 = vmatprep.subr.mxu0 0.0
    %491 = vmatpush2.msra.mxu0 %v236
    %492 = vmatprep.subr.mxu0 0.0
    %493 = vmatpush2.msra.mxu0 %v235
    %494 = vmatprep.subr.mxu0 0.0
    %495 = vmatpush2.msra.mxu0 %v234
    %496 = vmatprep.mubr.f32.mxu0 %v89
    %497 = vmatmul.mubr.f32.gmra.mxu0 %v88
    %v498 = vpop.f32.mrf.mxu0
    %v499 = vadd.f32 %v424, %v498
    %v500 = vpop.f32.mrf.mxu0
    %501 = vmatprep.mubr.f32.mxu0 %v97
    %502 = vmatmul.mubr.f32.gmra.mxu0 %v96
    %v503 = vpop.f32.mrf.mxu0
    %v504 = vadd.f32 %v429, %v503
    %v505 = vpop.f32.mrf.mxu0
    %506 = vdwg.mxu0
    %507 = vmatprep.subr.mxu0 0.0
    %508 = vmatpush1.msra.mxu0 %v265
    %509 = vmatprep.subr.mxu0 0.0
    %510 = vmatpush1.msra.mxu0 %v264
    %511 = vmatprep.subr.mxu0 0.0
    %512 = vmatpush1.msra.mxu0 %v263
    %513 = vmatprep.subr.mxu0 0.0
    %514 = vmatpush1.msra.mxu0 %v262
    %515 = vmatprep.subr.mxu0 0.0
    %516 = vmatpush1.msra.mxu0 %v261
    %517 = vmatprep.subr.mxu0 0.0
    %518 = vmatpush1.msra.mxu0 %v260
    %519 = vmatprep.subr.mxu0 0.0
    %520 = vmatpush1.msra.mxu0 %v259
    %521 = vmatprep.subr.mxu0 0.0
    %522 = vmatpush1.msra.mxu0 %v258
    %523 = vmatprep.subr.mxu0 0.0
    %524 = vmatpush1.msra.mxu0 %v257
    %525 = vmatprep.subr.mxu0 0.0
    %526 = vmatpush1.msra.mxu0 %v256
    %527 = vmatprep.subr.mxu0 0.0
    %528 = vmatpush1.msra.mxu0 %v255
    %529 = vmatprep.subr.mxu0 0.0
    %530 = vmatpush1.msra.mxu0 %v254
    %531 = vmatprep.subr.mxu0 0.0
    %532 = vmatpush1.msra.mxu0 %v253
    %533 = vmatprep.subr.mxu0 0.0
    %534 = vmatpush1.msra.mxu0 %v252
    %535 = vmatprep.subr.mxu0 0.0
    %536 = vmatpush1.msra.mxu0 %v251
    %537 = vmatprep.subr.mxu0 0.0
    %538 = vmatpush1.msra.mxu0 %v250
    %539 = vmatprep.subr.mxu0 0.0
    %540 = vmatpush2.msra.mxu0 %v281
    %541 = vmatprep.subr.mxu0 0.0
    %542 = vmatpush2.msra.mxu0 %v280
    %543 = vmatprep.subr.mxu0 0.0
    %544 = vmatpush2.msra.mxu0 %v279
    %545 = vmatprep.subr.mxu0 0.0
    %546 = vmatpush2.msra.mxu0 %v278
    %547 = vmatprep.subr.mxu0 0.0
    %548 = vmatpush2.msra.mxu0 %v277
    %549 = vmatprep.subr.mxu0 0.0
    %550 = vmatpush2.msra.mxu0 %v276
    %551 = vmatprep.subr.mxu0 0.0
    %552 = vmatpush2.msra.mxu0 %v275
    %553 = vmatprep.subr.mxu0 0.0
    %554 = vmatpush2.msra.mxu0 %v274
    %555 = vmatprep.subr.mxu0 0.0
    %556 = vmatpush2.msra.mxu0 %v273
    %557 = vmatprep.subr.mxu0 0.0
    %558 = vmatpush2.msra.mxu0 %v272
    %559 = vmatprep.subr.mxu0 0.0
    %560 = vmatpush2.msra.mxu0 %v271
    %561 = vmatprep.subr.mxu0 0.0
    %562 = vmatpush2.msra.mxu0 %v270
    %563 = vmatprep.subr.mxu0 0.0
    %564 = vmatpush2.msra.mxu0 %v269
    %565 = vmatprep.subr.mxu0 0.0
    %566 = vmatpush2.msra.mxu0 %v268
    %567 = vmatprep.subr.mxu0 0.0
    %568 = vmatpush2.msra.mxu0 %v267
    %569 = vmatprep.subr.mxu0 0.0
    %570 = vmatpush2.msra.mxu0 %v266
    %571 = vmatprep.mubr.f32.mxu0 %v91
    %572 = vmatmul.mubr.f32.gmra.mxu0 %v90
    %v573 = vpop.f32.mrf.mxu0
    %v574 = vadd.f32 %v499, %v573
    %v575 = vpop.f32.mrf.mxu0
    %576 = vmatprep.mubr.f32.mxu0 %v99
    %577 = vmatmul.mubr.f32.gmra.mxu0 %v98
    %v578 = vpop.f32.mrf.mxu0
    %v579 = vadd.f32 %v504, %v578
    %v580 = vpop.f32.mrf.mxu0
    %581 = vdwg.mxu0
    %v582 = vld [vmem:[%s4] sm:$0xff]
    %v583 = vld [vmem:[%s4 + $0x8] sm:$0xff]
    %v584 = vld [vmem:[%s4 + $0x10] sm:$0xff]
    %v585 = vld [vmem:[%s4 + $0x18] sm:$0xff]
    %v586 = vld [vmem:[%s4 + $0x20] sm:$0xff]
    %v587 = vld [vmem:[%s4 + $0x28] sm:$0xff]
    %v588 = vld [vmem:[%s4 + $0x30] sm:$0xff]
    %v589 = vld [vmem:[%s4 + $0x38] sm:$0xff]
    %v590 = vld [vmem:[%s4 + $0x40] sm:$0xff]
    %v591 = vld [vmem:[%s4 + $0x48] sm:$0xff]
    %v592 = vld [vmem:[%s4 + $0x50] sm:$0xff]
    %v593 = vld [vmem:[%s4 + $0x58] sm:$0xff]
    %v594 = vld [vmem:[%s4 + $0x60] sm:$0xff]
    %v595 = vld [vmem:[%s4 + $0x68] sm:$0xff]
    %v596 = vld [vmem:[%s4 + $0x70] sm:$0xff]
    %v597 = vld [vmem:[%s4 + $0x78] sm:$0xff]
    %v598 = vld [vmem:[%s4 + $0x80] sm:$0xff]
    %v599 = vld [vmem:[%s4 + $0x88] sm:$0xff]
    %v600 = vld [vmem:[%s4 + $0x90] sm:$0xff]
    %v601 = vld [vmem:[%s4 + $0x98] sm:$0xff]
    %v602 = vld [vmem:[%s4 + $0xa0] sm:$0xff]
    %v603 = vld [vmem:[%s4 + $0xa8] sm:$0xff]
    %v604 = vld [vmem:[%s4 + $0xb0] sm:$0xff]
    %v605 = vld [vmem:[%s4 + $0xb8] sm:$0xff]
    %v606 = vld [vmem:[%s4 + $0xc0] sm:$0xff]
    %v607 = vld [vmem:[%s4 + $0xc8] sm:$0xff]
    %v608 = vld [vmem:[%s4 + $0xd0] sm:$0xff]
    %v609 = vld [vmem:[%s4 + $0xd8] sm:$0xff]
    %v610 = vld [vmem:[%s4 + $0xe0] sm:$0xff]
    %v611 = vld [vmem:[%s4 + $0xe8] sm:$0xff]
    %v612 = vld [vmem:[%s4 + $0xf0] sm:$0xff]
    %v613 = vld [vmem:[%s4 + $0xf8] sm:$0xff]
    %v614 = vld [vmem:[%s4 + $0x100] sm:$0xff]
    %v615 = vld [vmem:[%s4 + $0x108] sm:$0xff]
    %v616 = vld [vmem:[%s4 + $0x110] sm:$0xff]
    %v617 = vld [vmem:[%s4 + $0x118] sm:$0xff]
    %v618 = vld [vmem:[%s4 + $0x120] sm:$0xff]
    %v619 = vld [vmem:[%s4 + $0x128] sm:$0xff]
    %v620 = vld [vmem:[%s4 + $0x130] sm:$0xff]
    %v621 = vld [vmem:[%s4 + $0x138] sm:$0xff]
    %v622 = vld [vmem:[%s4 + $0x140] sm:$0xff]
    %v623 = vld [vmem:[%s4 + $0x148] sm:$0xff]
    %v624 = vld [vmem:[%s4 + $0x150] sm:$0xff]
    %v625 = vld [vmem:[%s4 + $0x158] sm:$0xff]
    %v626 = vld [vmem:[%s4 + $0x160] sm:$0xff]
    %v627 = vld [vmem:[%s4 + $0x168] sm:$0xff]
    %v628 = vld [vmem:[%s4 + $0x170] sm:$0xff]
    %v629 = vld [vmem:[%s4 + $0x178] sm:$0xff]
    %v630 = vld [vmem:[%s4 + $0x180] sm:$0xff]
    %v631 = vld [vmem:[%s4 + $0x188] sm:$0xff]
    %v632 = vld [vmem:[%s4 + $0x190] sm:$0xff]
    %v633 = vld [vmem:[%s4 + $0x198] sm:$0xff]
    %v634 = vld [vmem:[%s4 + $0x1a0] sm:$0xff]
    %v635 = vld [vmem:[%s4 + $0x1a8] sm:$0xff]
    %v636 = vld [vmem:[%s4 + $0x1b0] sm:$0xff]
    %v637 = vld [vmem:[%s4 + $0x1b8] sm:$0xff]
    %v638 = vld [vmem:[%s4 + $0x1c0] sm:$0xff]
    %v639 = vld [vmem:[%s4 + $0x1c8] sm:$0xff]
    %v640 = vld [vmem:[%s4 + $0x1d0] sm:$0xff]
    %v641 = vld [vmem:[%s4 + $0x1d8] sm:$0xff]
    %v642 = vld [vmem:[%s4 + $0x1e0] sm:$0xff]
    %v643 = vld [vmem:[%s4 + $0x1e8] sm:$0xff]
    %v644 = vld [vmem:[%s4 + $0x1f0] sm:$0xff]
    %v645 = vld [vmem:[%s4 + $0x1f8] sm:$0xff]
    %v646 = vld [vmem:[%s4 + $0x200] sm:$0xff]
    %v647 = vld [vmem:[%s4 + $0x208] sm:$0xff]
    %v648 = vld [vmem:[%s4 + $0x210] sm:$0xff]
    %v649 = vld [vmem:[%s4 + $0x218] sm:$0xff]
    %v650 = vld [vmem:[%s4 + $0x220] sm:$0xff]
    %v651 = vld [vmem:[%s4 + $0x228] sm:$0xff]
    %v652 = vld [vmem:[%s4 + $0x230] sm:$0xff]
    %v653 = vld [vmem:[%s4 + $0x238] sm:$0xff]
    %v654 = vld [vmem:[%s4 + $0x240] sm:$0xff]
    %v655 = vld [vmem:[%s4 + $0x248] sm:$0xff]
    %v656 = vld [vmem:[%s4 + $0x250] sm:$0xff]
    %v657 = vld [vmem:[%s4 + $0x258] sm:$0xff]
    %v658 = vld [vmem:[%s4 + $0x260] sm:$0xff]
    %v659 = vld [vmem:[%s4 + $0x268] sm:$0xff]
    %v660 = vld [vmem:[%s4 + $0x270] sm:$0xff]
    %v661 = vld [vmem:[%s4 + $0x278] sm:$0xff]
    %v662 = vld [vmem:[%s4 + $0x280] sm:$0xff]
    %v663 = vld [vmem:[%s4 + $0x288] sm:$0xff]
    %v664 = vld [vmem:[%s4 + $0x290] sm:$0xff]
    %v665 = vld [vmem:[%s4 + $0x298] sm:$0xff]
    %v666 = vld [vmem:[%s4 + $0x2a0] sm:$0xff]
    %v667 = vld [vmem:[%s4 + $0x2a8] sm:$0xff]
    %v668 = vld [vmem:[%s4 + $0x2b0] sm:$0xff]
    %v669 = vld [vmem:[%s4 + $0x2b8] sm:$0xff]
    %v670 = vld [vmem:[%s4 + $0x2c0] sm:$0xff]
    %v671 = vld [vmem:[%s4 + $0x2c8] sm:$0xff]
    %v672 = vld [vmem:[%s4 + $0x2d0] sm:$0xff]
    %v673 = vld [vmem:[%s4 + $0x2d8] sm:$0xff]
    %v674 = vld [vmem:[%s4 + $0x2e0] sm:$0xff]
    %v675 = vld [vmem:[%s4 + $0x2e8] sm:$0xff]
    %v676 = vld [vmem:[%s4 + $0x2f0] sm:$0xff]
    %v677 = vld [vmem:[%s4 + $0x2f8] sm:$0xff]
    %v678 = vld [vmem:[%s4 + $0x300] sm:$0xff]
    %v679 = vld [vmem:[%s4 + $0x308] sm:$0xff]
    %v680 = vld [vmem:[%s4 + $0x310] sm:$0xff]
    %v681 = vld [vmem:[%s4 + $0x318] sm:$0xff]
    %v682 = vld [vmem:[%s4 + $0x320] sm:$0xff]
    %v683 = vld [vmem:[%s4 + $0x328] sm:$0xff]
    %v684 = vld [vmem:[%s4 + $0x330] sm:$0xff]
    %v685 = vld [vmem:[%s4 + $0x338] sm:$0xff]
    %v686 = vld [vmem:[%s4 + $0x340] sm:$0xff]
    %v687 = vld [vmem:[%s4 + $0x348] sm:$0xff]
    %v688 = vld [vmem:[%s4 + $0x350] sm:$0xff]
    %v689 = vld [vmem:[%s4 + $0x358] sm:$0xff]
    %v690 = vld [vmem:[%s4 + $0x360] sm:$0xff]
    %v691 = vld [vmem:[%s4 + $0x368] sm:$0xff]
    %v692 = vld [vmem:[%s4 + $0x370] sm:$0xff]
    %v693 = vld [vmem:[%s4 + $0x378] sm:$0xff]
    %v694 = vld [vmem:[%s4 + $0x380] sm:$0xff]
    %v695 = vld [vmem:[%s4 + $0x388] sm:$0xff]
    %v696 = vld [vmem:[%s4 + $0x390] sm:$0xff]
    %v697 = vld [vmem:[%s4 + $0x398] sm:$0xff]
    %v698 = vld [vmem:[%s4 + $0x3a0] sm:$0xff]
    %v699 = vld [vmem:[%s4 + $0x3a8] sm:$0xff]
    %v700 = vld [vmem:[%s4 + $0x3b0] sm:$0xff]
    %v701 = vld [vmem:[%s4 + $0x3b8] sm:$0xff]
    %v702 = vld [vmem:[%s4 + $0x3c0] sm:$0xff]
    %v703 = vld [vmem:[%s4 + $0x3c8] sm:$0xff]
    %v704 = vld [vmem:[%s4 + $0x3d0] sm:$0xff]
    %v705 = vld [vmem:[%s4 + $0x3d8] sm:$0xff]
    %v706 = vld [vmem:[%s4 + $0x3e0] sm:$0xff]
    %v707 = vld [vmem:[%s4 + $0x3e8] sm:$0xff]
    %v708 = vld [vmem:[%s4 + $0x3f0] sm:$0xff]
    %v709 = vld [vmem:[%s4 + $0x3f8] sm:$0xff]
    %710 = vmatprep.subr.mxu0 0.0
    %711 = vmatpush1.msra.mxu0 %v597
    %712 = vmatprep.subr.mxu0 0.0
    %713 = vmatpush1.msra.mxu0 %v596
    %714 = vmatprep.subr.mxu0 0.0
    %715 = vmatpush1.msra.mxu0 %v595
    %716 = vmatprep.subr.mxu0 0.0
    %717 = vmatpush1.msra.mxu0 %v594
    %718 = vmatprep.subr.mxu0 0.0
    %719 = vmatpush1.msra.mxu0 %v593
    %720 = vmatprep.subr.mxu0 0.0
    %721 = vmatpush1.msra.mxu0 %v592
    %722 = vmatprep.subr.mxu0 0.0
    %723 = vmatpush1.msra.mxu0 %v591
    %724 = vmatprep.subr.mxu0 0.0
    %725 = vmatpush1.msra.mxu0 %v590
    %726 = vmatprep.subr.mxu0 0.0
    %727 = vmatpush1.msra.mxu0 %v589
    %728 = vmatprep.subr.mxu0 0.0
    %729 = vmatpush1.msra.mxu0 %v588
    %730 = vmatprep.subr.mxu0 0.0
    %731 = vmatpush1.msra.mxu0 %v587
    %732 = vmatprep.subr.mxu0 0.0
    %733 = vmatpush1.msra.mxu0 %v586
    %734 = vmatprep.subr.mxu0 0.0
    %735 = vmatpush1.msra.mxu0 %v585
    %736 = vmatprep.subr.mxu0 0.0
    %737 = vmatpush1.msra.mxu0 %v584
    %738 = vmatprep.subr.mxu0 0.0
    %739 = vmatpush1.msra.mxu0 %v583
    %740 = vmatprep.subr.mxu0 0.0
    %741 = vmatpush1.msra.mxu0 %v582
    %742 = vmatprep.subr.mxu0 0.0
    %743 = vmatpush2.msra.mxu0 %v613
    %744 = vmatprep.subr.mxu0 0.0
    %745 = vmatpush2.msra.mxu0 %v612
    %746 = vmatprep.subr.mxu0 0.0
    %747 = vmatpush2.msra.mxu0 %v611
    %748 = vmatprep.subr.mxu0 0.0
    %749 = vmatpush2.msra.mxu0 %v610
    %750 = vmatprep.subr.mxu0 0.0
    %751 = vmatpush2.msra.mxu0 %v609
    %752 = vmatprep.subr.mxu0 0.0
    %753 = vmatpush2.msra.mxu0 %v608
    %754 = vmatprep.subr.mxu0 0.0
    %755 = vmatpush2.msra.mxu0 %v607
    %756 = vmatprep.subr.mxu0 0.0
    %757 = vmatpush2.msra.mxu0 %v606
    %758 = vmatprep.subr.mxu0 0.0
    %759 = vmatpush2.msra.mxu0 %v605
    %760 = vmatprep.subr.mxu0 0.0
    %761 = vmatpush2.msra.mxu0 %v604
    %762 = vmatprep.subr.mxu0 0.0
    %763 = vmatpush2.msra.mxu0 %v603
    %764 = vmatprep.subr.mxu0 0.0
    %765 = vmatpush2.msra.mxu0 %v602
    %766 = vmatprep.subr.mxu0 0.0
    %767 = vmatpush2.msra.mxu0 %v601
    %768 = vmatprep.subr.mxu0 0.0
    %769 = vmatpush2.msra.mxu0 %v600
    %770 = vmatprep.subr.mxu0 0.0
    %771 = vmatpush2.msra.mxu0 %v599
    %772 = vmatprep.subr.mxu0 0.0
    %773 = vmatpush2.msra.mxu0 %v598
    %774 = vmatprep.mubr.f32.mxu0 %v139
    %775 = vmatmul.mubr.f32.gmra.mxu0 %v138
    %v776 = vpop.f32.mrf.mxu0
    %v777 = vadd.f32 0.0, %v776
    %v778 = vpop.f32.mrf.mxu0
    %779 = vmatprep.mubr.f32.mxu0 %v147
    %780 = vmatmul.mubr.f32.gmra.mxu0 %v146
    %v781 = vpop.f32.mrf.mxu0
    %v782 = vadd.f32 0.0, %v781
    %v783 = vpop.f32.mrf.mxu0
    %784 = vdwg.mxu0
    %785 = vmatprep.subr.mxu0 0.0
    %786 = vmatpush1.msra.mxu0 %v629
    %787 = vmatprep.subr.mxu0 0.0
    %788 = vmatpush1.msra.mxu0 %v628
    %789 = vmatprep.subr.mxu0 0.0
    %790 = vmatpush1.msra.mxu0 %v627
    %791 = vmatprep.subr.mxu0 0.0
    %792 = vmatpush1.msra.mxu0 %v626
    %793 = vmatprep.subr.mxu0 0.0
    %794 = vmatpush1.msra.mxu0 %v625
    %795 = vmatprep.subr.mxu0 0.0
    %796 = vmatpush1.msra.mxu0 %v624
    %797 = vmatprep.subr.mxu0 0.0
    %798 = vmatpush1.msra.mxu0 %v623
    %799 = vmatprep.subr.mxu0 0.0
    %800 = vmatpush1.msra.mxu0 %v622
    %801 = vmatprep.subr.mxu0 0.0
    %802 = vmatpush1.msra.mxu0 %v621
    %803 = vmatprep.subr.mxu0 0.0
    %804 = vmatpush1.msra.mxu0 %v620
    %805 = vmatprep.subr.mxu0 0.0
    %806 = vmatpush1.msra.mxu0 %v619
    %807 = vmatprep.subr.mxu0 0.0
    %808 = vmatpush1.msra.mxu0 %v618
    %809 = vmatprep.subr.mxu0 0.0
    %810 = vmatpush1.msra.mxu0 %v617
    %811 = vmatprep.subr.mxu0 0.0
    %812 = vmatpush1.msra.mxu0 %v616
    %813 = vmatprep.subr.mxu0 0.0
    %814 = vmatpush1.msra.mxu0 %v615
    %815 = vmatprep.subr.mxu0 0.0
    %816 = vmatpush1.msra.mxu0 %v614
    %817 = vmatprep.subr.mxu0 0.0
    %818 = vmatpush2.msra.mxu0 %v645
    %819 = vmatprep.subr.mxu0 0.0
    %820 = vmatpush2.msra.mxu0 %v644
    %821 = vmatprep.subr.mxu0 0.0
    %822 = vmatpush2.msra.mxu0 %v643
    %823 = vmatprep.subr.mxu0 0.0
    %824 = vmatpush2.msra.mxu0 %v642
    %825 = vmatprep.subr.mxu0 0.0
    %826 = vmatpush2.msra.mxu0 %v641
    %827 = vmatprep.subr.mxu0 0.0
    %828 = vmatpush2.msra.mxu0 %v640
    %829 = vmatprep.subr.mxu0 0.0
    %830 = vmatpush2.msra.mxu0 %v639
    %831 = vmatprep.subr.mxu0 0.0
    %832 = vmatpush2.msra.mxu0 %v638
    %833 = vmatprep.subr.mxu0 0.0
    %834 = vmatpush2.msra.mxu0 %v637
    %835 = vmatprep.subr.mxu0 0.0
    %836 = vmatpush2.msra.mxu0 %v636
    %837 = vmatprep.subr.mxu0 0.0
    %838 = vmatpush2.msra.mxu0 %v635
    %839 = vmatprep.subr.mxu0 0.0
    %840 = vmatpush2.msra.mxu0 %v634
    %841 = vmatprep.subr.mxu0 0.0
    %842 = vmatpush2.msra.mxu0 %v633
    %843 = vmatprep.subr.mxu0 0.0
    %844 = vmatpush2.msra.mxu0 %v632
    %845 = vmatprep.subr.mxu0 0.0
    %846 = vmatpush2.msra.mxu0 %v631
    %847 = vmatprep.subr.mxu0 0.0
    %848 = vmatpush2.msra.mxu0 %v630
    %849 = vmatprep.mubr.f32.mxu0 %v141
    %850 = vmatmul.mubr.f32.gmra.mxu0 %v140
    %v851 = vpop.f32.mrf.mxu0
    %v852 = vadd.f32 %v777, %v851
    %v853 = vpop.f32.mrf.mxu0
    %854 = vmatprep.mubr.f32.mxu0 %v149
    %855 = vmatmul.mubr.f32.gmra.mxu0 %v148
    %v856 = vpop.f32.mrf.mxu0
    %v857 = vadd.f32 %v782, %v856
    %v858 = vpop.f32.mrf.mxu0
    %859 = vdwg.mxu0
    %860 = vmatprep.subr.mxu0 0.0
    %861 = vmatpush1.msra.mxu0 %v661
    %862 = vmatprep.subr.mxu0 0.0
    %863 = vmatpush1.msra.mxu0 %v660
    %864 = vmatprep.subr.mxu0 0.0
    %865 = vmatpush1.msra.mxu0 %v659
    %866 = vmatprep.subr.mxu0 0.0
    %867 = vmatpush1.msra.mxu0 %v658
    %868 = vmatprep.subr.mxu0 0.0
    %869 = vmatpush1.msra.mxu0 %v657
    %870 = vmatprep.subr.mxu0 0.0
    %871 = vmatpush1.msra.mxu0 %v656
    %872 = vmatprep.subr.mxu0 0.0
    %873 = vmatpush1.msra.mxu0 %v655
    %874 = vmatprep.subr.mxu0 0.0
    %875 = vmatpush1.msra.mxu0 %v654
    %876 = vmatprep.subr.mxu0 0.0
    %877 = vmatpush1.msra.mxu0 %v653
    %878 = vmatprep.subr.mxu0 0.0
    %879 = vmatpush1.msra.mxu0 %v652
    %880 = vmatprep.subr.mxu0 0.0
    %881 = vmatpush1.msra.mxu0 %v651
    %882 = vmatprep.subr.mxu0 0.0
    %883 = vmatpush1.msra.mxu0 %v650
    %884 = vmatprep.subr.mxu0 0.0
    %885 = vmatpush1.msra.mxu0 %v649
    %886 = vmatprep.subr.mxu0 0.0
    %887 = vmatpush1.msra.mxu0 %v648
    %888 = vmatprep.subr.mxu0 0.0
    %889 = vmatpush1.msra.mxu0 %v647
    %890 = vmatprep.subr.mxu0 0.0
    %891 = vmatpush1.msra.mxu0 %v646
    %892 = vmatprep.subr.mxu0 0.0
    %893 = vmatpush2.msra.mxu0 %v677
    %894 = vmatprep.subr.mxu0 0.0
    %895 = vmatpush2.msra.mxu0 %v676
    %896 = vmatprep.subr.mxu0 0.0
    %897 = vmatpush2.msra.mxu0 %v675
    %898 = vmatprep.subr.mxu0 0.0
    %899 = vmatpush2.msra.mxu0 %v674
    %900 = vmatprep.subr.mxu0 0.0
    %901 = vmatpush2.msra.mxu0 %v673
    %902 = vmatprep.subr.mxu0 0.0
    %903 = vmatpush2.msra.mxu0 %v672
    %904 = vmatprep.subr.mxu0 0.0
    %905 = vmatpush2.msra.mxu0 %v671
    %906 = vmatprep.subr.mxu0 0.0
    %907 = vmatpush2.msra.mxu0 %v670
    %908 = vmatprep.subr.mxu0 0.0
    %909 = vmatpush2.msra.mxu0 %v669
    %910 = vmatprep.subr.mxu0 0.0
    %911 = vmatpush2.msra.mxu0 %v668
    %912 = vmatprep.subr.mxu0 0.0
    %913 = vmatpush2.msra.mxu0 %v667
    %914 = vmatprep.subr.mxu0 0.0
    %915 = vmatpush2.msra.mxu0 %v666
    %916 = vmatprep.subr.mxu0 0.0
    %917 = vmatpush2.msra.mxu0 %v665
    %918 = vmatprep.subr.mxu0 0.0
    %919 = vmatpush2.msra.mxu0 %v664
    %920 = vmatprep.subr.mxu0 0.0
    %921 = vmatpush2.msra.mxu0 %v663
    %922 = vmatprep.subr.mxu0 0.0
    %923 = vmatpush2.msra.mxu0 %v662
    %924 = vmatprep.mubr.f32.mxu0 %v143
    %925 = vmatmul.mubr.f32.gmra.mxu0 %v142
    %v926 = vpop.f32.mrf.mxu0
    %v927 = vadd.f32 %v852, %v926
    %v928 = vpop.f32.mrf.mxu0
    %929 = vmatprep.mubr.f32.mxu0 %v151
    %930 = vmatmul.mubr.f32.gmra.mxu0 %v150
    %v931 = vpop.f32.mrf.mxu0
    %v932 = vadd.f32 %v857, %v931
    %v933 = vpop.f32.mrf.mxu0
    %934 = vdwg.mxu0
    %935 = vmatprep.subr.mxu0 0.0
    %936 = vmatpush1.msra.mxu0 %v693
    %937 = vmatprep.subr.mxu0 0.0
    %938 = vmatpush1.msra.mxu0 %v692
    %939 = vmatprep.subr.mxu0 0.0
    %940 = vmatpush1.msra.mxu0 %v691
    %941 = vmatprep.subr.mxu0 0.0
    %942 = vmatpush1.msra.mxu0 %v690
    %943 = vmatprep.subr.mxu0 0.0
    %944 = vmatpush1.msra.mxu0 %v689
    %945 = vmatprep.subr.mxu0 0.0
    %946 = vmatpush1.msra.mxu0 %v688
    %947 = vmatprep.subr.mxu0 0.0
    %948 = vmatpush1.msra.mxu0 %v687
    %949 = vmatprep.subr.mxu0 0.0
    %950 = vmatpush1.msra.mxu0 %v686
    %951 = vmatprep.subr.mxu0 0.0
    %952 = vmatpush1.msra.mxu0 %v685
    %953 = vmatprep.subr.mxu0 0.0
    %954 = vmatpush1.msra.mxu0 %v684
    %955 = vmatprep.subr.mxu0 0.0
    %956 = vmatpush1.msra.mxu0 %v683
    %957 = vmatprep.subr.mxu0 0.0
    %958 = vmatpush1.msra.mxu0 %v682
    %959 = vmatprep.subr.mxu0 0.0
    %960 = vmatpush1.msra.mxu0 %v681
    %961 = vmatprep.subr.mxu0 0.0
    %962 = vmatpush1.msra.mxu0 %v680
    %963 = vmatprep.subr.mxu0 0.0
    %964 = vmatpush1.msra.mxu0 %v679
    %965 = vmatprep.subr.mxu0 0.0
    %966 = vmatpush1.msra.mxu0 %v678
    %967 = vmatprep.subr.mxu0 0.0
    %968 = vmatpush2.msra.mxu0 %v709
    %969 = vmatprep.subr.mxu0 0.0
    %970 = vmatpush2.msra.mxu0 %v708
    %971 = vmatprep.subr.mxu0 0.0
    %972 = vmatpush2.msra.mxu0 %v707
    %973 = vmatprep.subr.mxu0 0.0
    %974 = vmatpush2.msra.mxu0 %v706
    %975 = vmatprep.subr.mxu0 0.0
    %976 = vmatpush2.msra.mxu0 %v705
    %977 = vmatprep.subr.mxu0 0.0
    %978 = vmatpush2.msra.mxu0 %v704
    %979 = vmatprep.subr.mxu0 0.0
    %980 = vmatpush2.msra.mxu0 %v703
    %981 = vmatprep.subr.mxu0 0.0
    %982 = vmatpush2.msra.mxu0 %v702
    %983 = vmatprep.subr.mxu0 0.0
    %984 = vmatpush2.msra.mxu0 %v701
    %985 = vmatprep.subr.mxu0 0.0
    %986 = vmatpush2.msra.mxu0 %v700
    %987 = vmatprep.subr.mxu0 0.0
    %988 = vmatpush2.msra.mxu0 %v699
    %989 = vmatprep.subr.mxu0 0.0
    %990 = vmatpush2.msra.mxu0 %v698
    %991 = vmatprep.subr.mxu0 0.0
    %992 = vmatpush2.msra.mxu0 %v697
    %993 = vmatprep.subr.mxu0 0.0
    %994 = vmatpush2.msra.mxu0 %v696
    %995 = vmatprep.subr.mxu0 0.0
    %996 = vmatpush2.msra.mxu0 %v695
    %997 = vmatprep.subr.mxu0 0.0
    %998 = vmatpush2.msra.mxu0 %v694
    %999 = vmatprep.mubr.f32.mxu0 %v145
    %1000 = vmatmul.mubr.f32.gmra.mxu0 %v144
    %v1001 = vpop.f32.mrf.mxu0
    %v1002 = vadd.f32 %v927, %v1001
    %v1003 = vpop.f32.mrf.mxu0
    %1004 = vmatprep.mubr.f32.mxu0 %v153
    %1005 = vmatmul.mubr.f32.gmra.mxu0 %v152
    %v1006 = vpop.f32.mrf.mxu0
    %v1007 = vadd.f32 %v932, %v1006
    %v1008 = vpop.f32.mrf.mxu0
    %1009 = vdwg.mxu0
    %1010 = vset.pattern.permute.xlu0 0
    %1011 = vperm.xlu0 %1010, %v34
    %v1012 = vpop.permute.xlu0 %1011
    %1013 = vset.pattern.permute.xlu0 0
    %1014 = vperm.xlu0 %1013, %v35
    %v1015 = vpop.permute.xlu0 %1014
    %1016 = vset.pattern.permute.xlu0 0
    %1017 = vperm.xlu0 %1016, %v36
    %v1018 = vpop.permute.xlu0 %1017
    %vm1019 = vcmp.eq.s32.totalorder %v1012, %v38
    %vm1020 = vcmp.eq.s32.totalorder %v1012, %v39
    %vm1021 = vcmp.eq.s32.totalorder %v1012, %v40
    %vm1022 = vcmp.eq.s32.totalorder %v1012, %v41
    %vm1023 = vcmp.eq.s32.totalorder %v1012, %v42
    %vm1024 = vcmp.eq.s32.totalorder %v1012, %v43
    %vm1025 = vcmp.eq.s32.totalorder %v1012, %v44
    %vm1026 = vcmp.eq.s32.totalorder %v1012, %v45
    %vm1027 = vcmp.eq.s32.totalorder %v1015, %v38
    %vm1028 = vcmp.eq.s32.totalorder %v1015, %v39
    %vm1029 = vcmp.eq.s32.totalorder %v1015, %v40
    %vm1030 = vcmp.eq.s32.totalorder %v1015, %v41
    %vm1031 = vcmp.eq.s32.totalorder %v1015, %v42
    %vm1032 = vcmp.eq.s32.totalorder %v1015, %v43
    %vm1033 = vcmp.eq.s32.totalorder %v1015, %v44
    %vm1034 = vcmp.eq.s32.totalorder %v1015, %v45
    %vm1035 = vcmp.eq.s32.totalorder %v1018, %v38
    %vm1036 = vcmp.eq.s32.totalorder %v1018, %v39
    %vm1037 = vcmp.eq.s32.totalorder %v1018, %v40
    %vm1038 = vcmp.eq.s32.totalorder %v1018, %v41
    %vm1039 = vcmp.eq.s32.totalorder %v1018, %v42
    %vm1040 = vcmp.eq.s32.totalorder %v1018, %v43
    %vm1041 = vcmp.eq.s32.totalorder %v1018, %v44
    %vm1042 = vcmp.eq.s32.totalorder %v1018, %v45
    %v1043 = vsel %vm1019, 1, 0
    %v1044 = vsel %vm1020, 1, 0
    %v1045 = vsel %vm1021, 1, 0
    %v1046 = vsel %vm1022, 1, 0
    %v1047 = vsel %vm1023, 1, 0
    %v1048 = vsel %vm1024, 1, 0
    %v1049 = vsel %vm1025, 1, 0
    %v1050 = vsel %vm1026, 1, 0
    %v1051 = vsel %vm1027, 1, 0
    %v1052 = vsel %vm1028, 1, 0
    %v1053 = vsel %vm1029, 1, 0
    %v1054 = vsel %vm1030, 1, 0
    %v1055 = vsel %vm1031, 1, 0
    %v1056 = vsel %vm1032, 1, 0
    %v1057 = vsel %vm1033, 1, 0
    %v1058 = vsel %vm1034, 1, 0
    %v1059 = vsel %vm1035, 1, 0
    %v1060 = vsel %vm1036, 1, 0
    %v1061 = vsel %vm1037, 1, 0
    %v1062 = vsel %vm1038, 1, 0
    %v1063 = vsel %vm1039, 1, 0
    %v1064 = vsel %vm1040, 1, 0
    %v1065 = vsel %vm1041, 1, 0
    %v1066 = vsel %vm1042, 1, 0
    %v1067 = vcvt.s32.f32 %v1043
    %v1068 = vcvt.s32.f32 %v1044
    %v1069 = vcvt.s32.f32 %v1045
    %v1070 = vcvt.s32.f32 %v1046
    %v1071 = vcvt.s32.f32 %v1047
    %v1072 = vcvt.s32.f32 %v1048
    %v1073 = vcvt.s32.f32 %v1049
    %v1074 = vcvt.s32.f32 %v1050
    %v1075 = vcvt.s32.f32 %v1051
    %v1076 = vcvt.s32.f32 %v1052
    %v1077 = vcvt.s32.f32 %v1053
    %v1078 = vcvt.s32.f32 %v1054
    %v1079 = vcvt.s32.f32 %v1055
    %v1080 = vcvt.s32.f32 %v1056
    %v1081 = vcvt.s32.f32 %v1057
    %v1082 = vcvt.s32.f32 %v1058
    %v1083 = vcvt.s32.f32 %v1059
    %v1084 = vcvt.s32.f32 %v1060
    %v1085 = vcvt.s32.f32 %v1061
    %v1086 = vcvt.s32.f32 %v1062
    %v1087 = vcvt.s32.f32 %v1063
    %v1088 = vcvt.s32.f32 %v1064
    %v1089 = vcvt.s32.f32 %v1065
    %v1090 = vcvt.s32.f32 %v1066
    %1091 = vmatprep.subr.mxu0 0.0
    %1092 = vmatpush1.msra.mxu0 %v597
    %1093 = vmatprep.subr.mxu0 0.0
    %1094 = vmatpush1.msra.mxu0 %v596
    %1095 = vmatprep.subr.mxu0 0.0
    %1096 = vmatpush1.msra.mxu0 %v595
    %1097 = vmatprep.subr.mxu0 0.0
    %1098 = vmatpush1.msra.mxu0 %v594
    %1099 = vmatprep.subr.mxu0 0.0
    %1100 = vmatpush1.msra.mxu0 %v593
    %1101 = vmatprep.subr.mxu0 0.0
    %1102 = vmatpush1.msra.mxu0 %v592
    %1103 = vmatprep.subr.mxu0 0.0
    %1104 = vmatpush1.msra.mxu0 %v591
    %1105 = vmatprep.subr.mxu0 0.0
    %1106 = vmatpush1.msra.mxu0 %v590
    %1107 = vmatprep.subr.mxu0 0.0
    %1108 = vmatpush1.msra.mxu0 %v589
    %1109 = vmatprep.subr.mxu0 0.0
    %1110 = vmatpush1.msra.mxu0 %v588
    %1111 = vmatprep.subr.mxu0 0.0
    %1112 = vmatpush1.msra.mxu0 %v587
    %1113 = vmatprep.subr.mxu0 0.0
    %1114 = vmatpush1.msra.mxu0 %v586
    %1115 = vmatprep.subr.mxu0 0.0
    %1116 = vmatpush1.msra.mxu0 %v585
    %1117 = vmatprep.subr.mxu0 0.0
    %1118 = vmatpush1.msra.mxu0 %v584
    %1119 = vmatprep.subr.mxu0 0.0
    %1120 = vmatpush1.msra.mxu0 %v583
    %1121 = vmatprep.subr.mxu0 0.0
    %1122 = vmatpush1.msra.mxu0 %v582
    %1123 = vmatprep.subr.mxu0 0.0
    %1124 = vmatpush2.msra.mxu0 %v613
    %1125 = vmatprep.subr.mxu0 0.0
    %1126 = vmatpush2.msra.mxu0 %v612
    %1127 = vmatprep.subr.mxu0 0.0
    %1128 = vmatpush2.msra.mxu0 %v611
    %1129 = vmatprep.subr.mxu0 0.0
    %1130 = vmatpush2.msra.mxu0 %v610
    %1131 = vmatprep.subr.mxu0 0.0
    %1132 = vmatpush2.msra.mxu0 %v609
    %1133 = vmatprep.subr.mxu0 0.0
    %1134 = vmatpush2.msra.mxu0 %v608
    %1135 = vmatprep.subr.mxu0 0.0
    %1136 = vmatpush2.msra.mxu0 %v607
    %1137 = vmatprep.subr.mxu0 0.0
    %1138 = vmatpush2.msra.mxu0 %v606
    %1139 = vmatprep.subr.mxu0 0.0
    %1140 = vmatpush2.msra.mxu0 %v605
    %1141 = vmatprep.subr.mxu0 0.0
    %1142 = vmatpush2.msra.mxu0 %v604
    %1143 = vmatprep.subr.mxu0 0.0
    %1144 = vmatpush2.msra.mxu0 %v603
    %1145 = vmatprep.subr.mxu0 0.0
    %1146 = vmatpush2.msra.mxu0 %v602
    %1147 = vmatprep.subr.mxu0 0.0
    %1148 = vmatpush2.msra.mxu0 %v601
    %1149 = vmatprep.subr.mxu0 0.0
    %1150 = vmatpush2.msra.mxu0 %v600
    %1151 = vmatprep.subr.mxu0 0.0
    %1152 = vmatpush2.msra.mxu0 %v599
    %1153 = vmatprep.subr.mxu0 0.0
    %1154 = vmatpush2.msra.mxu0 %v598
    %1155 = vmatprep.mubr.f32.mxu0 %v1068
    %1156 = vmatmul.mubr.f32.gmra.mxu0 %v1067
    %v1157 = vpop.f32.mrf.mxu0
    %v1158 = vadd.f32 0.0, %v1157
    %v1159 = vpop.f32.mrf.mxu0
    %1160 = vmatprep.mubr.f32.mxu0 %v1076
    %1161 = vmatmul.mubr.f32.gmra.mxu0 %v1075
    %v1162 = vpop.f32.mrf.mxu0
    %v1163 = vadd.f32 0.0, %v1162
    %v1164 = vpop.f32.mrf.mxu0
    %1165 = vmatprep.mubr.f32.mxu0 %v1084
    %1166 = vmatmul.mubr.f32.gmra.mxu0 %v1083
    %v1167 = vpop.f32.mrf.mxu0
    %v1168 = vadd.f32 0.0, %v1167
    %v1169 = vpop.f32.mrf.mxu0
    %1170 = vdwg.mxu0
    %1171 = vmatprep.subr.mxu0 0.0
    %1172 = vmatpush1.msra.mxu0 %v629
    %1173 = vmatprep.subr.mxu0 0.0
    %1174 = vmatpush1.msra.mxu0 %v628
    %1175 = vmatprep.subr.mxu0 0.0
    %1176 = vmatpush1.msra.mxu0 %v627
    %1177 = vmatprep.subr.mxu0 0.0
    %1178 = vmatpush1.msra.mxu0 %v626
    %1179 = vmatprep.subr.mxu0 0.0
    %1180 = vmatpush1.msra.mxu0 %v625
    %1181 = vmatprep.subr.mxu0 0.0
    %1182 = vmatpush1.msra.mxu0 %v624
    %1183 = vmatprep.subr.mxu0 0.0
    %1184 = vmatpush1.msra.mxu0 %v623
    %1185 = vmatprep.subr.mxu0 0.0
    %1186 = vmatpush1.msra.mxu0 %v622
    %1187 = vmatprep.subr.mxu0 0.0
    %1188 = vmatpush1.msra.mxu0 %v621
    %1189 = vmatprep.subr.mxu0 0.0
    %1190 = vmatpush1.msra.mxu0 %v620
    %1191 = vmatprep.subr.mxu0 0.0
    %1192 = vmatpush1.msra.mxu0 %v619
    %1193 = vmatprep.subr.mxu0 0.0
    %1194 = vmatpush1.msra.mxu0 %v618
    %1195 = vmatprep.subr.mxu0 0.0
    %1196 = vmatpush1.msra.mxu0 %v617
    %1197 = vmatprep.subr.mxu0 0.0
    %1198 = vmatpush1.msra.mxu0 %v616
    %1199 = vmatprep.subr.mxu0 0.0
    %1200 = vmatpush1.msra.mxu0 %v615
    %1201 = vmatprep.subr.mxu0 0.0
    %1202 = vmatpush1.msra.mxu0 %v614
    %1203 = vmatprep.subr.mxu0 0.0
    %1204 = vmatpush2.msra.mxu0 %v645
    %1205 = vmatprep.subr.mxu0 0.0
    %1206 = vmatpush2.msra.mxu0 %v644
    %1207 = vmatprep.subr.mxu0 0.0
    %1208 = vmatpush2.msra.mxu0 %v643
    %1209 = vmatprep.subr.mxu0 0.0
    %1210 = vmatpush2.msra.mxu0 %v642
    %1211 = vmatprep.subr.mxu0 0.0
    %1212 = vmatpush2.msra.mxu0 %v641
    %1213 = vmatprep.subr.mxu0 0.0
    %1214 = vmatpush2.msra.mxu0 %v640
    %1215 = vmatprep.subr.mxu0 0.0
    %1216 = vmatpush2.msra.mxu0 %v639
    %1217 = vmatprep.subr.mxu0 0.0
    %1218 = vmatpush2.msra.mxu0 %v638
    %1219 = vmatprep.subr.mxu0 0.0
    %1220 = vmatpush2.msra.mxu0 %v637
    %1221 = vmatprep.subr.mxu0 0.0
    %1222 = vmatpush2.msra.mxu0 %v636
    %1223 = vmatprep.subr.mxu0 0.0
    %1224 = vmatpush2.msra.mxu0 %v635
    %1225 = vmatprep.subr.mxu0 0.0
    %1226 = vmatpush2.msra.mxu0 %v634
    %1227 = vmatprep.subr.mxu0 0.0
    %1228 = vmatpush2.msra.mxu0 %v633
    %1229 = vmatprep.subr.mxu0 0.0
    %1230 = vmatpush2.msra.mxu0 %v632
    %1231 = vmatprep.subr.mxu0 0.0
    %1232 = vmatpush2.msra.mxu0 %v631
    %1233 = vmatprep.subr.mxu0 0.0
    %1234 = vmatpush2.msra.mxu0 %v630
    %1235 = vmatprep.mubr.f32.mxu0 %v1070
    %1236 = vmatmul.mubr.f32.gmra.mxu0 %v1069
    %v1237 = vpop.f32.mrf.mxu0
    %v1238 = vadd.f32 %v1158, %v1237
    %v1239 = vpop.f32.mrf.mxu0
    %1240 = vmatprep.mubr.f32.mxu0 %v1078
    %1241 = vmatmul.mubr.f32.gmra.mxu0 %v1077
    %v1242 = vpop.f32.mrf.mxu0
    %v1243 = vadd.f32 %v1163, %v1242
    %v1244 = vpop.f32.mrf.mxu0
    %1245 = vmatprep.mubr.f32.mxu0 %v1086
    %1246 = vmatmul.mubr.f32.gmra.mxu0 %v1085
    %v1247 = vpop.f32.mrf.mxu0
    %v1248 = vadd.f32 %v1168, %v1247
    %v1249 = vpop.f32.mrf.mxu0
    %1250 = vdwg.mxu0
    %1251 = vmatprep.subr.mxu0 0.0
    %1252 = vmatpush1.msra.mxu0 %v661
    %1253 = vmatprep.subr.mxu0 0.0
    %1254 = vmatpush1.msra.mxu0 %v660
    %1255 = vmatprep.subr.mxu0 0.0
    %1256 = vmatpush1.msra.mxu0 %v659
    %1257 = vmatprep.subr.mxu0 0.0
    %1258 = vmatpush1.msra.mxu0 %v658
    %1259 = vmatprep.subr.mxu0 0.0
    %1260 = vmatpush1.msra.mxu0 %v657
    %1261 = vmatprep.subr.mxu0 0.0
    %1262 = vmatpush1.msra.mxu0 %v656
    %1263 = vmatprep.subr.mxu0 0.0
    %1264 = vmatpush1.msra.mxu0 %v655
    %1265 = vmatprep.subr.mxu0 0.0
    %1266 = vmatpush1.msra.mxu0 %v654
    %1267 = vmatprep.subr.mxu0 0.0
    %1268 = vmatpush1.msra.mxu0 %v653
    %1269 = vmatprep.subr.mxu0 0.0
    %1270 = vmatpush1.msra.mxu0 %v652
    %1271 = vmatprep.subr.mxu0 0.0
    %1272 = vmatpush1.msra.mxu0 %v651
    %1273 = vmatprep.subr.mxu0 0.0
    %1274 = vmatpush1.msra.mxu0 %v650
    %1275 = vmatprep.subr.mxu0 0.0
    %1276 = vmatpush1.msra.mxu0 %v649
    %1277 = vmatprep.subr.mxu0 0.0
    %1278 = vmatpush1.msra.mxu0 %v648
    %1279 = vmatprep.subr.mxu0 0.0
    %1280 = vmatpush1.msra.mxu0 %v647
    %1281 = vmatprep.subr.mxu0 0.0
    %1282 = vmatpush1.msra.mxu0 %v646
    %1283 = vmatprep.subr.mxu0 0.0
    %1284 = vmatpush2.msra.mxu0 %v677
    %1285 = vmatprep.subr.mxu0 0.0
    %1286 = vmatpush2.msra.mxu0 %v676
    %1287 = vmatprep.subr.mxu0 0.0
    %1288 = vmatpush2.msra.mxu0 %v675
    %1289 = vmatprep.subr.mxu0 0.0
    %1290 = vmatpush2.msra.mxu0 %v674
    %1291 = vmatprep.subr.mxu0 0.0
    %1292 = vmatpush2.msra.mxu0 %v673
    %1293 = vmatprep.subr.mxu0 0.0
    %1294 = vmatpush2.msra.mxu0 %v672
    %1295 = vmatprep.subr.mxu0 0.0
    %1296 = vmatpush2.msra.mxu0 %v671
    %1297 = vmatprep.subr.mxu0 0.0
    %1298 = vmatpush2.msra.mxu0 %v670
    %1299 = vmatprep.subr.mxu0 0.0
    %1300 = vmatpush2.msra.mxu0 %v669
    %1301 = vmatprep.subr.mxu0 0.0
    %1302 = vmatpush2.msra.mxu0 %v668
    %1303 = vmatprep.subr.mxu0 0.0
    %1304 = vmatpush2.msra.mxu0 %v667
    %1305 = vmatprep.subr.mxu0 0.0
    %1306 = vmatpush2.msra.mxu0 %v666
    %1307 = vmatprep.subr.mxu0 0.0
    %1308 = vmatpush2.msra.mxu0 %v665
    %1309 = vmatprep.subr.mxu0 0.0
    %1310 = vmatpush2.msra.mxu0 %v664
    %1311 = vmatprep.subr.mxu0 0.0
    %1312 = vmatpush2.msra.mxu0 %v663
    %1313 = vmatprep.subr.mxu0 0.0
    %1314 = vmatpush2.msra.mxu0 %v662
    %1315 = vmatprep.mubr.f32.mxu0 %v1072
    %1316 = vmatmul.mubr.f32.gmra.mxu0 %v1071
    %v1317 = vpop.f32.mrf.mxu0
    %v1318 = vadd.f32 %v1238, %v1317
    %v1319 = vpop.f32.mrf.mxu0
    %1320 = vmatprep.mubr.f32.mxu0 %v1080
    %1321 = vmatmul.mubr.f32.gmra.mxu0 %v1079
    %v1322 = vpop.f32.mrf.mxu0
    %v1323 = vadd.f32 %v1243, %v1322
    %v1324 = vpop.f32.mrf.mxu0
    %1325 = vmatprep.mubr.f32.mxu0 %v1088
    %1326 = vmatmul.mubr.f32.gmra.mxu0 %v1087
    %v1327 = vpop.f32.mrf.mxu0
    %v1328 = vadd.f32 %v1248, %v1327
    %v1329 = vpop.f32.mrf.mxu0
    %1330 = vdwg.mxu0
    %1331 = vmatprep.subr.mxu0 0.0
    %1332 = vmatpush1.msra.mxu0 %v693
    %1333 = vmatprep.subr.mxu0 0.0
    %1334 = vmatpush1.msra.mxu0 %v692
    %1335 = vmatprep.subr.mxu0 0.0
    %1336 = vmatpush1.msra.mxu0 %v691
    %1337 = vmatprep.subr.mxu0 0.0
    %1338 = vmatpush1.msra.mxu0 %v690
    %1339 = vmatprep.subr.mxu0 0.0
    %1340 = vmatpush1.msra.mxu0 %v689
    %1341 = vmatprep.subr.mxu0 0.0
    %1342 = vmatpush1.msra.mxu0 %v688
    %1343 = vmatprep.subr.mxu0 0.0
    %1344 = vmatpush1.msra.mxu0 %v687
    %1345 = vmatprep.subr.mxu0 0.0
    %1346 = vmatpush1.msra.mxu0 %v686
    %1347 = vmatprep.subr.mxu0 0.0
    %1348 = vmatpush1.msra.mxu0 %v685
    %1349 = vmatprep.subr.mxu0 0.0
    %1350 = vmatpush1.msra.mxu0 %v684
    %1351 = vmatprep.subr.mxu0 0.0
    %1352 = vmatpush1.msra.mxu0 %v683
    %1353 = vmatprep.subr.mxu0 0.0
    %1354 = vmatpush1.msra.mxu0 %v682
    %1355 = vmatprep.subr.mxu0 0.0
    %1356 = vmatpush1.msra.mxu0 %v681
    %1357 = vmatprep.subr.mxu0 0.0
    %1358 = vmatpush1.msra.mxu0 %v680
    %1359 = vmatprep.subr.mxu0 0.0
    %1360 = vmatpush1.msra.mxu0 %v679
    %1361 = vmatprep.subr.mxu0 0.0
    %1362 = vmatpush1.msra.mxu0 %v678
    %1363 = vmatprep.subr.mxu0 0.0
    %1364 = vmatpush2.msra.mxu0 %v709
    %1365 = vmatprep.subr.mxu0 0.0
    %1366 = vmatpush2.msra.mxu0 %v708
    %1367 = vmatprep.subr.mxu0 0.0
    %1368 = vmatpush2.msra.mxu0 %v707
    %1369 = vmatprep.subr.mxu0 0.0
    %1370 = vmatpush2.msra.mxu0 %v706
    %1371 = vmatprep.subr.mxu0 0.0
    %1372 = vmatpush2.msra.mxu0 %v705
    %1373 = vmatprep.subr.mxu0 0.0
    %1374 = vmatpush2.msra.mxu0 %v704
    %1375 = vmatprep.subr.mxu0 0.0
    %1376 = vmatpush2.msra.mxu0 %v703
    %1377 = vmatprep.subr.mxu0 0.0
    %1378 = vmatpush2.msra.mxu0 %v702
    %1379 = vmatprep.subr.mxu0 0.0
    %1380 = vmatpush2.msra.mxu0 %v701
    %1381 = vmatprep.subr.mxu0 0.0
    %1382 = vmatpush2.msra.mxu0 %v700
    %1383 = vmatprep.subr.mxu0 0.0
    %1384 = vmatpush2.msra.mxu0 %v699
    %1385 = vmatprep.subr.mxu0 0.0
    %1386 = vmatpush2.msra.mxu0 %v698
    %1387 = vmatprep.subr.mxu0 0.0
    %1388 = vmatpush2.msra.mxu0 %v697
    %1389 = vmatprep.subr.mxu0 0.0
    %1390 = vmatpush2.msra.mxu0 %v696
    %1391 = vmatprep.subr.mxu0 0.0
    %1392 = vmatpush2.msra.mxu0 %v695
    %1393 = vmatprep.subr.mxu0 0.0
    %1394 = vmatpush2.msra.mxu0 %v694
    %1395 = vmatprep.mubr.f32.mxu0 %v1074
    %1396 = vmatmul.mubr.f32.gmra.mxu0 %v1073
    %v1397 = vpop.f32.mrf.mxu0
    %v1398 = vadd.f32 %v1318, %v1397
    %v1399 = vpop.f32.mrf.mxu0
    %1400 = vmatprep.mubr.f32.mxu0 %v1082
    %1401 = vmatmul.mubr.f32.gmra.mxu0 %v1081
    %v1402 = vpop.f32.mrf.mxu0
    %v1403 = vadd.f32 %v1323, %v1402
    %v1404 = vpop.f32.mrf.mxu0
    %1405 = vmatprep.mubr.f32.mxu0 %v1090
    %1406 = vmatmul.mubr.f32.gmra.mxu0 %v1089
    %v1407 = vpop.f32.mrf.mxu0
    %v1408 = vadd.f32 %v1328, %v1407
    %v1409 = vpop.f32.mrf.mxu0
    %1410 = vdwg.mxu0
    %v1411 = vmul.f32 %v574, %v1002
    %v1412 = vmul.f32 %v579, %v1007
    %vm1413 = vcmask 261120
    %v1414 = vsel %vm1413, %v1411, 0.0
    %1415 = vadd.xlane.f32.xlu0 %v1414
    %v1416 = vpop.xlane.xlu0 %1415
    %v1417 = vsel %vm1413, %v1412, 0.0
    %1418 = vadd.xlane.f32.xlu0 %v1417
    %v1419 = vpop.xlane.xlu0 %1418
    %v1421 = vsel %vm1413, %v574, 0
    %v1424 = vsel %vm1413, %v579, 0
    %v1427 = vsel %vm1413, %v1398, 0
    %v1430 = vsel %vm1413, %v1403, 0
    %v1433 = vsel %vm1413, %v1408, 0
    %1435 = vmatprep.subr.mxu0 0.0
    %1436 = vmatpush1.xpose.msra.mxu0 0.0
    %1437 = vmatprep.subr.mxu0 0.0
    %1438 = vmatpush1.xpose.msra.mxu0 0.0
    %1439 = vmatprep.subr.mxu0 0.0
    %1440 = vmatpush1.xpose.msra.mxu0 0.0
    %1441 = vmatprep.subr.mxu0 0.0
    %1442 = vmatpush1.xpose.msra.mxu0 0.0
    %1443 = vmatprep.subr.mxu0 0.0
    %1444 = vmatpush1.xpose.msra.mxu0 0.0
    %1445 = vmatprep.subr.mxu0 0.0
    %1446 = vmatpush1.xpose.msra.mxu0 0.0
    %1447 = vmatprep.subr.mxu0 0.0
    %1448 = vmatpush1.xpose.msra.mxu0 0.0
    %1449 = vmatprep.subr.mxu0 0.0
    %1450 = vmatpush1.xpose.msra.mxu0 0.0
    %1451 = vmatprep.subr.mxu0 0.0
    %1452 = vmatpush1.xpose.msra.mxu0 0.0
    %1453 = vmatprep.subr.mxu0 0.0
    %1454 = vmatpush1.xpose.msra.mxu0 0.0
    %1455 = vmatprep.subr.mxu0 0.0
    %1456 = vmatpush1.xpose.msra.mxu0 0.0
    %1457 = vmatprep.subr.mxu0 0.0
    %1458 = vmatpush1.xpose.msra.mxu0 0.0
    %1459 = vmatprep.subr.mxu0 0.0
    %1460 = vmatpush1.xpose.msra.mxu0 0.0
    %1461 = vmatprep.subr.mxu0 0.0
    %1462 = vmatpush1.xpose.msra.mxu0 %v1433
    %1463 = vmatprep.subr.mxu0 0.0
    %1464 = vmatpush1.xpose.msra.mxu0 %v1430
    %1465 = vmatprep.subr.mxu0 0.0
    %1466 = vmatpush1.xpose.msra.mxu0 %v1427
    %1467 = vmatprep.subr.mxu0 0.0
    %1468 = vmatpush2.xpose.msra.mxu0 0.0
    %1469 = vmatprep.subr.mxu0 0.0
    %1470 = vmatpush2.xpose.msra.mxu0 0.0
    %1471 = vmatprep.subr.mxu0 0.0
    %1472 = vmatpush2.xpose.msra.mxu0 0.0
    %1473 = vmatprep.subr.mxu0 0.0
    %1474 = vmatpush2.xpose.msra.mxu0 0.0
    %1475 = vmatprep.subr.mxu0 0.0
    %1476 = vmatpush2.xpose.msra.mxu0 0.0
    %1477 = vmatprep.subr.mxu0 0.0
    %1478 = vmatpush2.xpose.msra.mxu0 0.0
    %1479 = vmatprep.subr.mxu0 0.0
    %1480 = vmatpush2.xpose.msra.mxu0 0.0
    %1481 = vmatprep.subr.mxu0 0.0
    %1482 = vmatpush2.xpose.msra.mxu0 0.0
    %1483 = vmatprep.subr.mxu0 0.0
    %1484 = vmatpush2.xpose.msra.mxu0 0.0
    %1485 = vmatprep.subr.mxu0 0.0
    %1486 = vmatpush2.xpose.msra.mxu0 0.0
    %1487 = vmatprep.subr.mxu0 0.0
    %1488 = vmatpush2.xpose.msra.mxu0 0.0
    %1489 = vmatprep.subr.mxu0 0.0
    %1490 = vmatpush2.xpose.msra.mxu0 0.0
    %1491 = vmatprep.subr.mxu0 0.0
    %1492 = vmatpush2.xpose.msra.mxu0 0.0
    %1493 = vmatprep.subr.mxu0 0.0
    %1494 = vmatpush2.xpose.msra.mxu0 0.0
    %1495 = vmatprep.subr.mxu0 0.0
    %1496 = vmatpush2.xpose.msra.mxu0 0.0
    %1497 = vmatprep.subr.mxu0 0.0
    %1498 = vmatpush2.xpose.msra.mxu0 0.0
    %1499 = vmatprep.mubr.f32.mxu0 0.0
    %1500 = vmatmul.mubr.f32.gmra.mxu0 %v1421
    %v1501 = vpop.f32.mrf.mxu0
    %v1502 = vadd.f32 0.0, %v1501
    %v1503 = vpop.f32.mrf.mxu0
    %1504 = vmatprep.mubr.f32.mxu0 0.0
    %1505 = vmatmul.mubr.f32.gmra.mxu0 %v1424
    %v1506 = vpop.f32.mrf.mxu0
    %v1507 = vadd.f32 0.0, %v1506
    %v1508 = vpop.f32.mrf.mxu0
    %1509 = vdwg.mxu0
    %v1510 = vsub.f32 0.0, %v1502
    %v1511 = vsub.f32 0.0, %v1507
    %v1512 = vmin.f32 %v1416, 0.0
    %v1513 = vmin.f32 %v1419, 0.0
    %v1514 = vand.u32 2147483647, %v1416
    %v1515 = vand.u32 2147483647, %v1419
    %v1516 = vsub.f32 0.0, %v1514
    %v1517 = vsub.f32 0.0, %v1515
    %v1518 = vmul.f32 %v1516, 1.442695
    %v1519 = vpow.pop %v1518
    %v1520 = vmul.f32 %v1517, 1.442695
    %v1521 = vpow.pop %v1520
    %v1522 = vadd.f32 %v1519, 1.0
    %v1523 = vlog2.pop %v1522
    %v1524 = vmul.f32 %v1523, 0.6931472
    %v1525 = vmul.f32 -0.5, %v1519
    %v1526 = vadd.f32 %v1525, 1.0
    %v1527 = vmul.f32 %v1526, %v1519
    %v1528 = vand.u32 2147483647, %v1519
    %vm1529 = vcmp.lt.f32.partialorder %v1528, 0.0004427343
    %v1530 = vsel %vm1529, %v1527, %v1524
    %v1531 = vadd.f32 %v1521, 1.0
    %v1532 = vlog2.pop %v1531
    %v1533 = vmul.f32 %v1532, 0.6931472
    %v1534 = vmul.f32 -0.5, %v1521
    %v1535 = vadd.f32 %v1534, 1.0
    %v1536 = vmul.f32 %v1535, %v1521
    %v1537 = vand.u32 2147483647, %v1521
    %vm1538 = vcmp.lt.f32.partialorder %v1537, 0.0004427343
    %v1539 = vsel %vm1538, %v1536, %v1533
    %v1540 = vsub.f32 %v1512, %v1530
    %v1541 = vsub.f32 %v1513, %v1539
    %v1542 = vmin.f32 %v1510, 0.0
    %v1543 = vmin.f32 %v1511, 0.0
    %v1544 = vand.u32 2147483647, %v1510
    %v1545 = vand.u32 2147483647, %v1511
    %v1546 = vsub.f32 0.0, %v1544
    %v1547 = vsub.f32 0.0, %v1545
    %v1548 = vmul.f32 %v1546, 1.442695
    %v1549 = vpow.pop %v1548
    %v1550 = vmul.f32 %v1547, 1.442695
    %v1551 = vpow.pop %v1550
    %v1552 = vadd.f32 %v1549, 1.0
    %v1553 = vlog2.pop %v1552
    %v1554 = vmul.f32 %v1553, 0.6931472
    %v1555 = vmul.f32 -0.5, %v1549
    %v1556 = vadd.f32 %v1555, 1.0
    %v1557 = vmul.f32 %v1556, %v1549
    %v1558 = vand.u32 2147483647, %v1549
    %vm1559 = vcmp.lt.f32.partialorder %v1558, 0.0004427343
    %v1560 = vsel %vm1559, %v1557, %v1554
    %v1561 = vadd.f32 %v1551, 1.0
    %v1562 = vlog2.pop %v1561
    %v1563 = vmul.f32 %v1562, 0.6931472
    %v1564 = vmul.f32 -0.5, %v1551
    %v1565 = vadd.f32 %v1564, 1.0
    %v1566 = vmul.f32 %v1565, %v1551
    %v1567 = vand.u32 2147483647, %v1551
    %vm1568 = vcmp.lt.f32.partialorder %v1567, 0.0004427343
    %v1569 = vsel %vm1568, %v1566, %v1563
    %v1570 = vsub.f32 %v1542, %v1560
    %v1571 = vsub.f32 %v1543, %v1569
    %vm1572 = vcmask 162816
    %v1573 = vsel %vm1572, %v1570, 0.0
    %1574 = vadd.xlane.f32.xlu0 %v1573
    %v1575 = vpop.xlane.xlu0 %1574
    %v1576 = vsel %vm1572, %v1571, 0.0
    %1577 = vadd.xlane.f32.xlu0 %v1576
    %v1578 = vpop.xlane.xlu0 %1577
    %v1579 = vadd.f32 %v1540, %v1575
    %v1580 = vadd.f32 %v1541, %v1578
    %s1581 = smul.u32 0, 16
    %v1582 = vlaneseq
    %v1583 = vshrl.u32 %v1582, 7
    %v1584 = vadd.s32 %v1583, 8
    %v1585 = vstv %s1581
    %v1586 = vadd.s32 %v1585, %v1583
    %v1587 = vadd.s32 %v1585, %v1584
    %vm1588 = vcmp.lt.s32.totalorder %v1586, 13
    %vm1589 = vcmp.lt.s32.totalorder %v1587, 13
    %v1590 = vsel %vm1588, %v1579, 0.0
    %v1591 = vsel %vm1589, %v1580, 0.0
    %v1592 = vld [vmem:[#allocation2] sm:$0xff]
    %v1593 = vld [vmem:[#allocation2 + $0x8] sm:$0xff]
    %v1594 = vadd.f32 %v1592, %v1590
    %v1595 = vadd.f32 %v1593, %v1591
    %vm1596 = vcmask 7168
    %1597 = vst.msk [vmem:[#allocation2] sm:$0xff] %vm1596, %v1594
    %1598 = vst.msk [vmem:[#allocation2 + $0x8] sm:$0xff] %vm1596, %v1595
    // Predicated region
    $region26: #{tpu_custom_call.1} parent=1 // pred_check
      %p1599 = pneg %p21
    $region27: #{tpu_custom_call.1} parent=1 // pred_check_branch
      %1601 = sbr.rel (%p1599) target = $region29
    $region28: #{tpu_custom_call.1} parent=1 // pred_region
      %v1602 = vld [vmem:[#allocation2] sm:$0xff]
      %v1603 = vld [vmem:[#allocation2 + $0x8] sm:$0xff]
      %v1604 = vsel %vm1596, %v1602, 0.0
      %v1605 = vsel %vm1596, %v1603, 0.0
      %v1606 = vadd.f32 %v1604, %v1605
      %1607 = vadd.xlane.f32.xlu0 %v1606
      %v1608 = vpop.xlane.xlu0 %1607
      %v1609 = vrot.slane %v1608, 4
      %v1610 = vadd.f32 %v1608, %v1609
      %v1611 = vrot.slane %v1610, 2
      %v1612 = vadd.f32 %v1610, %v1611
      %v1613 = vrot.slane %v1612, 1
      %v1614 = vadd.f32 %v1612, %v1613
      %s1615 = vtos %v1614
      %s1616 = ssub.f32 0.0, %s1615
      %s1617 = smul.f32 %s1616, 0.07692308
      %v1618 = vstv %s1617
      %vm1619 = vcmask 0
      %1620 = vst.msk [vmem:[#allocation3] sm:$0x1] %vm1619, %v1618
    $region29: #{tpu_custom_call.1} parent=1 // pred_fallthru
      _
    // Predicated region
    $region30: #{tpu_custom_call.1} parent=1 // pred_check
      _
    $region31: #{tpu_custom_call.1} parent=1 // pred_check_branch
      %1622 = sbr.rel (0) target = $region33
    $region32: #{tpu_custom_call.1} parent=1 // pred_region
      %s1624 = ssub.s32 16, 16
      %1625 = vsyncadd [#allocation4], %s1624
      %s1627 = sshll.u32 [#allocation3], 4
      %s1628 = int_to_ptr.vmem [resolvable:$true] %s1627
      %1630 = dma.vmem_to_hbm [thread:$0]  %s1628, 16, %s5, [#allocation4]
    $region33: #{tpu_custom_call.1} parent=1 // pred_fallthru
      _
    // Predicated region
    $region34: #{tpu_custom_call.1} parent=1 // pred_check
      _
    $region35: #{tpu_custom_call.1} parent=1 // pred_check_branch
      %1632 = sbr.rel (0) target = $region37
    $region36: #{tpu_custom_call.1} parent=1 // pred_region
      %1633 = dma.done [#allocation4], 16
    $region37: #{tpu_custom_call.1} parent=1 // pred_fallthru
      _
    %1634 = vsyncpa [#allocation4], 1

</llo_original>
